<compile_context>
chip_gen: v7x
topology: tpu7x:2x2x1
jax: 0.10.0
libtpu: 0.0.40
codegen_flags: <defaults>
</compile_context>

<pallas_src>
import jax
import jax.numpy as jnp
from jax import lax
from jax.experimental import pallas as pl
from jax.experimental.pallas import tpu as pltpu

# Explicit VMEM budget with headroom for double-buffering; safe on
# v5e/v6e (128 MiB physical) and v7x (64 MiB physical).
_VMEM_LIMIT = 48 * 1024 * 1024


def _pick_tile(n, preferred):
    """Largest tile in {preferred, 512, 256, 128} dividing n, else n (full dim).

    All candidates are multiples of 128, so lane-side tiles stay lane-dense;
    falling back to the full dimension is always a legal block shape.
    """
    for t in (preferred, 512, 256, 128):
        if t <= n and n % t == 0:
            return t
    return n


# ----------------------------------------------------------------------------
# Fused multi-layer LGConv propagation kernel
# ----------------------------------------------------------------------------
def _fused_propagate_kernel(adj_ref, ego_ref, out_ref, xa_ref, xb_ref, acc_ref):
    """grid = (n_layers, N//tm, N//tk).

    adj_ref : (tm, tk) bf16   tile of normalized adjacency (streamed)
    ego_ref : (N, D)   bf16   layer-0 embeddings (VMEM resident)
    out_ref : (tm, D)  f32    output block for (layer l, row tile i)
    xa/xb   : (N, D)   bf16   ping/pong scratch holding the current layer input
    acc_ref : (tm, D)  f32    MXU accumulator over the k axis
    """
    l = pl.program_id(0)
    i = pl.program_id(1)
    k = pl.program_id(2)
    nl = pl.num_programs(0)
    nk = pl.num_programs(2)

    tm = acc_ref.shape[0]
    tk = adj_ref.shape[1]

    # Very first grid step: stage the ego embeddings into the ping buffer
    # (pong is initialized too so every read below is well-defined).
    @pl.when((l == 0) & (i == 0) & (k == 0))
    def _():
        xa_ref[...] = ego_ref[...]
        xb_ref[...] = ego_ref[...]

    # Zero the accumulator at the start of every k-reduction.
    @pl.when(k == 0)
    def _():
        acc_ref[...] = jnp.zeros_like(acc_ref)

    # Even layers read the ping buffer and write pong; odd layers the reverse.
    in_is_a = (l % 2) == 0
    koff = pl.multiple_of(k * tk, tk)
    x_a_blk = xa_ref[pl.ds(koff, tk), :]
    x_b_blk = xb_ref[pl.ds(koff, tk), :]
    x_in = jnp.where(in_is_a, x_a_blk, x_b_blk)

    acc_ref[...] += jnp.dot(adj_ref[...], x_in,
                            preferred_element_type=jnp.float32)

    is_last_k = k == nk - 1
    not_last_layer = l < nl - 1
    ioff = pl.multiple_of(i * tm, tm)

    # Finished the row tile for this layer: emit it and feed the next layer.
    @pl.when(is_last_k)
    def _():
        out_ref[...] = acc_ref[...]

    @pl.when(is_last_k & not_last_layer & in_is_a)
    def _():
        xb_ref[pl.ds(ioff, tm), :] = acc_ref[...].astype(xb_ref.dtype)

    @pl.when(is_last_k & not_last_layer & jnp.logical_not(in_is_a))
    def _():
        xa_ref[pl.ds(ioff, tm), :] = acc_ref[...].astype(xa_ref.dtype)


def propagate_embeddings(gu_weight, gi_weight, adj_norm, n_layers, num_users,
                         tm=256, tk=256):
    """Equivalent of LRGCCFModel.propagate_embeddings (concat of all layers)."""
    ego = jnp.concatenate([gu_weight, gi_weight], axis=0)      # (N, D) f32
    n, d = ego.shape
    if n_layers == 0:
        return ego[:num_users], ego[num_users:]

    tm = _pick_tile(n, tm)
    tk = _pick_tile(n, tk)

    adj_bf16 = adj_norm.astype(jnp.bfloat16)   # dominant HBM traffic -> bf16
    ego_bf16 = ego.astype(jnp.bfloat16)

    layer_out = pl.pallas_call(
        _fused_propagate_kernel,
        out_shape=jax.ShapeDtypeStruct((n_layers, n, d), jnp.float32),
        grid_spec=pltpu.PrefetchScalarGridSpec(
            num_scalar_prefetch=0,
            grid=(n_layers, n // tm, n // tk),
            in_specs=[
                pl.BlockSpec((tm, tk), lambda l, i, k: (i, k)),  # A: streamed
                pl.BlockSpec((n, d), lambda l, i, k: (0, 0)),    # ego: resident
            ],
            out_specs=pl.BlockSpec((None, tm, d), lambda l, i, k: (l, i, 0)),
            scratch_shapes=[
                pltpu.VMEM((n, d), jnp.bfloat16),                # x ping
                pltpu.VMEM((n, d), jnp.bfloat16),                # x pong
                pltpu.VMEM((tm, d), jnp.float32),                # accumulator
            ],
        ),
        compiler_params=pltpu.CompilerParams(
            # The layer and k axes are true reductions/dependencies, and the
            # row axis feeds the next layer's scratch, so all stay sequential.
            dimension_semantics=("arbitrary", "arbitrary", "arbitrary"),
            vmem_limit_bytes=_VMEM_LIMIT,
        ),
    )(adj_bf16, ego_bf16)

    all_embeddings = jnp.concatenate(
        [ego] + [layer_out[l] for l in range(n_layers)], axis=1)
    return all_embeddings[:num_users], all_embeddings[num_users:]


# ----------------------------------------------------------------------------
# forward: xui = sum(gamma_u * gamma_i, -1)  (lane-dense output)
# ----------------------------------------------------------------------------
def _score_kernel(gut_ref, git_ref, o_ref):
    # gut/git: (D, tb); reduce over the sublane (D) axis -> (1, tb) lane-dense.
    o_ref[...] = jnp.sum(gut_ref[...] * git_ref[...], axis=0, keepdims=True)


def lrgccf_forward(gamma_u, gamma_i, tb=128):
    """Equivalent of LRGCCFModel.forward: returns (xui, gamma_u, gamma_i)."""
    b, d = gamma_u.shape
    assert gamma_i.shape == (b, d)
    tb = _pick_tile(b, tb)
    # Wrapper-side transpose (layout plumbing) so the batch lands on lanes.
    gut = gamma_u.T
    git = gamma_i.T
    xui = pl.pallas_call(
        _score_kernel,
        out_shape=jax.ShapeDtypeStruct((1, b), jnp.float32),
        grid_spec=pltpu.PrefetchScalarGridSpec(
            num_scalar_prefetch=0,
            grid=(b // tb,),
            in_specs=[
                pl.BlockSpec((d, tb), lambda j: (0, j)),
                pl.BlockSpec((d, tb), lambda j: (0, j)),
            ],
            out_specs=pl.BlockSpec((1, tb), lambda j: (0, j)),
        ),
        compiler_params=pltpu.CompilerParams(
            dimension_semantics=("parallel",),
        ),
    )(gut, git)
    return xui[0], gamma_u, gamma_i


# ----------------------------------------------------------------------------
# predict: gu @ gi^T  (tiled bf16 MXU matmul, no in-kernel transpose)
# ----------------------------------------------------------------------------
def _predict_kernel(gu_ref, gi_ref, o_ref):
    o_ref[...] = lax.dot_general(
        gu_ref[...], gi_ref[...],
        dimension_numbers=(((1,), (1,)), ((), ())),
        preferred_element_type=jnp.float32,
    )


def lrgccf_predict(gu, gi, tu=256, ti=256):
    u, d = gu.shape
    i, d2 = gi.shape
    assert d == d2
    tu = _pick_tile(u, tu)
    ti = _pick_tile(i, ti)
    gu16 = gu.astype(jnp.bfloat16)
    gi16 = gi.astype(jnp.bfloat16)
    return pl.pallas_call(
        _predict_kernel,
        out_shape=jax.ShapeDtypeStruct((u, i), jnp.float32),
        grid_spec=pltpu.PrefetchScalarGridSpec(
            num_scalar_prefetch=0,
            grid=(u // tu, i // ti),
            in_specs=[
                pl.BlockSpec((tu, d), lambda a, b: (a, 0)),
                pl.BlockSpec((ti, d), lambda a, b: (b, 0)),
            ],
            out_specs=pl.BlockSpec((tu, ti), lambda a, b: (a, b)),
        ),
        compiler_params=pltpu.CompilerParams(
            dimension_semantics=("parallel", "parallel"),  # shards over 2 TCs on v7x
            vmem_limit_bytes=_VMEM_LIMIT,
        ),
    )(gu16, gi16)


# ----------------------------------------------------------------------------
# Plain-JAX glue: adjacency normalization (fill_diag + symmetric gcn_norm)
# ----------------------------------------------------------------------------
def build_normalized_adj(adj, normalize=True):
    n = adj.shape[0]
    adj = adj.at[jnp.diag_indices(n)].set(1.0)       # fill_diag(adj, 1.0)
    if not normalize:
        return adj
    deg = jnp.sum(adj, axis=1)
    dinv = jnp.where(deg > 0.0, 1.0 / jnp.sqrt(deg), 0.0)
    return dinv[:, None] * adj * dinv[None, :]


# ----------------------------------------------------------------------------
# Demo / smoke test
# ----------------------------------------------------------------------------
if __name__ == "__main__":
    num_users, num_items = 128, 512
    embed_k = 64
    n_layers = 2
    batch = 256
    n_nodes = num_users + num_items

    key = jax.random.PRNGKey(0)
    k_gu, k_gi, k_adj, k_u, k_p = jax.random.split(key, 5)

    # torch.nn.init.normal_(weight, std=0.01)
    gu_weight = 0.01 * jax.random.normal(k_gu, (num_users, embed_k), jnp.float32)
    gi_weight = 0.01 * jax.random.normal(k_gi, (num_items, embed_k), jnp.float32)

    # Synthetic bipartite interaction graph -> dense symmetric adjacency.
    r = (jax.random.uniform(k_adj, (num_users, num_items)) < 0.1).astype(jnp.float32)
    adj = jnp.zeros((n_nodes, n_nodes), jnp.float32)
    adj = adj.at[:num_users, num_users:].set(r)
    adj = adj.at[num_users:, :num_users].set(r.T)

    adj_norm = build_normalized_adj(adj, normalize=True)

    # Fused multi-layer propagation (single Pallas call, bf16-streamed A).
    gu, gi = propagate_embeddings(gu_weight, gi_weight, adj_norm,
                                  n_layers, num_users)

    # forward on a batch of (user, pos_item) pairs (lane-dense score kernel).
    users = jax.random.randint(k_u, (batch,), 0, num_users)
    pos = jax.random.randint(k_p, (batch,), 0, num_items)
    xui, gamma_u, gamma_i = lrgccf_forward(gu[users], gi[pos])

    # Full user x item score matrix (tiled bf16 MXU matmul) == model.predict.
    preds = lrgccf_predict(gu, gi)

    jax.block_until_ready((xui, gamma_u, gamma_i, preds))

    # --- Reference checks in plain f32 JAX --------------------------------
    ego = jnp.concatenate([gu_weight, gi_weight], axis=0)
    ref_all = [ego]
    for _ in range(n_layers):
        ref_all.append(adj_norm @ ref_all[-1])
    ref_all = jnp.concatenate(ref_all, axis=1)

    all_emb = jnp.concatenate([gu, gi], axis=0)
    # bf16 operands + f32 accumulation -> small relative error vs f32 ref.
    assert jnp.allclose(all_emb, ref_all, atol=1e-4, rtol=3e-2), "propagation mismatch"

    ref_xui = jnp.sum(gu[users] * gi[pos], axis=1)
    assert jnp.allclose(xui, ref_xui, atol=1e-5, rtol=1e-5), "xui mismatch"

    ref_preds = gu @ gi.T
    assert jnp.allclose(preds, ref_preds, atol=5e-4, rtol=3e-2), "predict mismatch"

    # TODO(synk): train_step (BPR loss + Adam update) and get_top_k are
    # optimizer / ranking utilities, not part of the forward pass; omitted.
    print("KERNEL_OK")
</pallas_src>

<mosaic_0001>
module attributes {stable_mosaic.version = 11 : i64} {
  func.func @_fused_propagate_kernel(%arg0: i32, %arg1: i32, %arg2: i32, %arg3: memref<128x128xbf16, #tpu.memory_space<vmem>>, %arg4: memref<640x64xbf16, #tpu.memory_space<vmem>>, %arg5: memref<1x128x64xf32, #tpu.memory_space<vmem>>, %arg6: memref<640x64xbf16, #tpu.memory_space<vmem>>, %arg7: memref<640x64xbf16, #tpu.memory_space<vmem>>, %arg8: memref<128x64xf32, #tpu.memory_space<vmem>>) attributes {dimension_semantics = [#tpu.dimension_semantics<arbitrary>, #tpu.dimension_semantics<arbitrary>, #tpu.dimension_semantics<arbitrary>], iteration_bounds = array<i64: 2, 5, 5>, scalar_prefetch = 0 : i64, scratch_operands = 3 : i64, tpu.core_type = #tpu.core_type<tc>, window_params = [{transform_indices = @transform_0, window_bounds = array<i64: 128, 128>}, {pipeline_mode = #tpu.pipeline_mode<synchronous>, transform_indices = @transform_1, window_bounds = array<i64: 640, 64>}, {transform_indices = @transform_2, window_bounds = array<i64: 1, 128, 64>}]} {
    %c0_i32 = arith.constant 0 : i32
    %0 = arith.cmpi eq, %arg0, %c0_i32 : i32
    %c0_i32_0 = arith.constant 0 : i32
    %1 = arith.cmpi eq, %arg1, %c0_i32_0 : i32
    %2 = arith.andi %0, %1 : i1
    %c0_i32_1 = arith.constant 0 : i32
    %3 = arith.cmpi eq, %arg2, %c0_i32_1 : i32
    %4 = arith.andi %2, %3 : i1
    %5 = arith.extui %4 : i1 to i32
    %c0_i32_2 = arith.constant 0 : i32
    %6 = arith.cmpi ne, %5, %c0_i32_2 : i32
    scf.if %6 {
      %c0_22 = arith.constant 0 : index
      %c0_23 = arith.constant 0 : index
      %48 = vector.load %arg4[%c0_22, %c0_23] : memref<640x64xbf16, #tpu.memory_space<vmem>>, vector<640x64xbf16>
      %c0_24 = arith.constant 0 : index
      %c0_25 = arith.constant 0 : index
      %49 = vector.load %arg6[%c0_24, %c0_25] : memref<640x64xbf16, #tpu.memory_space<vmem>>, vector<640x64xbf16>
      tpu.vector_store %arg6[%c0_24, %c0_25], %48 {strides = array<i32>} : memref<640x64xbf16, #tpu.memory_space<vmem>>, vector<640x64xbf16>,
      %c0_26 = arith.constant 0 : index
      %c0_27 = arith.constant 0 : index
      %50 = vector.load %arg4[%c0_26, %c0_27] : memref<640x64xbf16, #tpu.memory_space<vmem>>, vector<640x64xbf16>
      %c0_28 = arith.constant 0 : index
      %c0_29 = arith.constant 0 : index
      %51 = vector.load %arg7[%c0_28, %c0_29] : memref<640x64xbf16, #tpu.memory_space<vmem>>, vector<640x64xbf16>
      tpu.vector_store %arg7[%c0_28, %c0_29], %50 {strides = array<i32>} : memref<640x64xbf16, #tpu.memory_space<vmem>>, vector<640x64xbf16>,
    } else {
    }
    %c0_i32_3 = arith.constant 0 : i32
    %7 = arith.cmpi eq, %arg2, %c0_i32_3 : i32
    %8 = arith.extui %7 : i1 to i32
    %c0_i32_4 = arith.constant 0 : i32
    %9 = arith.cmpi ne, %8, %c0_i32_4 : i32
    scf.if %9 {
      %cst_22 = arith.constant 0.000000e+00 : f32
      %48 = vector.broadcast %cst_22 : f32 to vector<128x64xf32>
      %c0_23 = arith.constant 0 : index
      %c0_24 = arith.constant 0 : index
      %49 = vector.load %arg8[%c0_23, %c0_24] : memref<128x64xf32, #tpu.memory_space<vmem>>, vector<128x64xf32>
      tpu.vector_store %arg8[%c0_23, %c0_24], %48 {strides = array<i32>} : memref<128x64xf32, #tpu.memory_space<vmem>>, vector<128x64xf32>,
    } else {
    }
    %c2_i32 = arith.constant 2 : i32
    %c0_i32_5 = arith.constant 0 : i32
    %10 = arith.cmpi eq, %c2_i32, %c0_i32_5 : i32
    %c1_i32 = arith.constant 1 : i32
    %11 = arith.select %10, %c1_i32, %c2_i32 : i32
    %12 = arith.remsi %arg0, %11 : i32
    %c0_i32_6 = arith.constant 0 : i32
    %13 = arith.cmpi ne, %12, %c0_i32_6 : i32
    %c0_i32_7 = arith.constant 0 : i32
    %14 = arith.cmpi slt, %12, %c0_i32_7 : i32
    %c0_i32_8 = arith.constant 0 : i32
    %15 = arith.cmpi slt, %11, %c0_i32_8 : i32
    %16 = arith.xori %14, %15 : i1
    %17 = arith.andi %16, %13 : i1
    %18 = arith.addi %12, %11 : i32
    %19 = arith.select %17, %18, %12 : i32
    %c0_i32_9 = arith.constant 0 : i32
    %20 = arith.cmpi eq, %19, %c0_i32_9 : i32
    %c128_i32 = arith.constant 128 : i32
    %21 = arith.muli %arg2, %c128_i32 : i32
    %22 = tpu.assume_multiple %21, 128 : i32
    %23 = arith.index_cast %22 : i32 to index
    %c0 = arith.constant 0 : index
    %24 = vector.load %arg6[%23, %c0] : memref<640x64xbf16, #tpu.memory_space<vmem>>, vector<128x64xbf16>
    %25 = arith.index_cast %22 : i32 to index
    %c0_10 = arith.constant 0 : index
    %26 = vector.load %arg7[%25, %c0_10] : memref<640x64xbf16, #tpu.memory_space<vmem>>, vector<128x64xbf16>
    %27 = arith.select %20, %24, %26 : vector<128x64xbf16>
    %c0_11 = arith.constant 0 : index
    %c0_12 = arith.constant 0 : index
    %28 = vector.load %arg8[%c0_11, %c0_12] : memref<128x64xf32, #tpu.memory_space<vmem>>, vector<128x64xf32>
    %c0_13 = arith.constant 0 : index
    %c0_14 = arith.constant 0 : index
    %29 = vector.load %arg3[%c0_13, %c0_14] : memref<128x128xbf16, #tpu.memory_space<vmem>>, vector<128x128xbf16>
    %cst = arith.constant dense<0.000000e+00> : vector<128x64xf32>
    %30 = tpu.matmul %29, %27, %cst {dimension_numbers = #tpu.dot_dimension_numbers<[1], [0], [0], [1], [0, 0, 1, 1], [], []>} : vector<128x128xbf16>, vector<128x64xbf16>, vector<128x64xf32> -> vector<128x64xf32>
    %31 = arith.addf %28, %30 : vector<128x64xf32>
    %c0_15 = arith.constant 0 : index
    %c0_16 = arith.constant 0 : index
    %32 = vector.load %arg8[%c0_15, %c0_16] : memref<128x64xf32, #tpu.memory_space<vmem>>, vector<128x64xf32>
    tpu.vector_store %arg8[%c0_15, %c0_16], %31 {strides = array<i32>} : memref<128x64xf32, #tpu.memory_space<vmem>>, vector<128x64xf32>,
    %c4_i32 = arith.constant 4 : i32
    %33 = arith.cmpi eq, %arg2, %c4_i32 : i32
    %c1_i32_17 = arith.constant 1 : i32
    %34 = arith.cmpi slt, %arg0, %c1_i32_17 : i32
    %c128_i32_18 = arith.constant 128 : i32
    %35 = arith.muli %arg1, %c128_i32_18 : i32
    %36 = tpu.assume_multiple %35, 128 : i32
    %37 = arith.extui %33 : i1 to i32
    %c0_i32_19 = arith.constant 0 : i32
    %38 = arith.cmpi ne, %37, %c0_i32_19 : i32
    scf.if %38 {
      %c0_22 = arith.constant 0 : index
      %c0_23 = arith.constant 0 : index
      %48 = vector.load %arg8[%c0_22, %c0_23] : memref<128x64xf32, #tpu.memory_space<vmem>>, vector<128x64xf32>
      %c0_24 = arith.constant 0 : index
      %c0_25 = arith.constant 0 : index
      %c0_26 = arith.constant 0 : index
      %49 = vector.load %arg5[%c0_24, %c0_25, %c0_26] : memref<1x128x64xf32, #tpu.memory_space<vmem>>, vector<1x128x64xf32>
      %50 = vector.shape_cast %49 : vector<1x128x64xf32> to vector<128x64xf32>
      %51 = vector.shape_cast %48 : vector<128x64xf32> to vector<1x128x64xf32>
      tpu.vector_store %arg5[%c0_24, %c0_25, %c0_26], %51 {strides = array<i32>} : memref<1x128x64xf32, #tpu.memory_space<vmem>>, vector<1x128x64xf32>,
    } else {
    }
    %39 = arith.andi %33, %34 : i1
    %40 = arith.andi %39, %20 : i1
    %41 = arith.extui %40 : i1 to i32
    %c0_i32_20 = arith.constant 0 : i32
    %42 = arith.cmpi ne, %41, %c0_i32_20 : i32
    scf.if %42 {
      %c0_22 = arith.constant 0 : index
      %c0_23 = arith.constant 0 : index
      %48 = vector.load %arg8[%c0_22, %c0_23] : memref<128x64xf32, #tpu.memory_space<vmem>>, vector<128x64xf32>
      %49 = arith.truncf %48 : vector<128x64xf32> to vector<128x64xbf16>
      %50 = arith.index_cast %36 : i32 to index
      %c0_24 = arith.constant 0 : index
      %51 = vector.load %arg7[%50, %c0_24] : memref<640x64xbf16, #tpu.memory_space<vmem>>, vector<128x64xbf16>
      tpu.vector_store %arg7[%50, %c0_24], %49 {strides = array<i32>} : memref<640x64xbf16, #tpu.memory_space<vmem>>, vector<128x64xbf16>,
    } else {
    }
    %43 = arith.andi %33, %34 : i1
    %true = arith.constant true
    %44 = arith.xori %20, %true : i1
    %45 = arith.andi %43, %44 : i1
    %46 = arith.extui %45 : i1 to i32
    %c0_i32_21 = arith.constant 0 : i32
    %47 = arith.cmpi ne, %46, %c0_i32_21 : i32
    scf.if %47 {
      %c0_22 = arith.constant 0 : index
      %c0_23 = arith.constant 0 : index
      %48 = vector.load %arg8[%c0_22, %c0_23] : memref<128x64xf32, #tpu.memory_space<vmem>>, vector<128x64xf32>
      %49 = arith.truncf %48 : vector<128x64xf32> to vector<128x64xbf16>
      %50 = arith.index_cast %36 : i32 to index
      %c0_24 = arith.constant 0 : index
      %51 = vector.load %arg6[%50, %c0_24] : memref<640x64xbf16, #tpu.memory_space<vmem>>, vector<128x64xbf16>
      tpu.vector_store %arg6[%50, %c0_24], %49 {strides = array<i32>} : memref<640x64xbf16, #tpu.memory_space<vmem>>, vector<128x64xbf16>,
    } else {
    }
    return
  }
  func.func @transform_0(%arg0: i32, %arg1: i32, %arg2: i32) -> (i32, i32) {
    %c0_i32 = arith.constant 0 : i32
    return %arg1, %arg2 : i32, i32
  }
  func.func @transform_1(%arg0: i32, %arg1: i32, %arg2: i32) -> (i32, i32) {
    %c0_i32 = arith.constant 0 : i32
    %c0_i32_0 = arith.constant 0 : i32
    %c0_i32_1 = arith.constant 0 : i32
    return %c0_i32, %c0_i32_0 : i32, i32
  }
  func.func @transform_2(%arg0: i32, %arg1: i32, %arg2: i32) -> (i32, i32, i32) {
    %c0_i32 = arith.constant 0 : i32
    %c0_i32_0 = arith.constant 0 : i32
    return %arg0, %arg1, %c0_i32 : i32, i32, i32
  }
}

</mosaic_0001>

<llo_original>
// kernel: tpu_custom_call.1
$region0: #{tpu_custom_call.1}
  #allocation0 [shape = 'u32[]', space=smem, size = 0x4, offset = 0x4, fixed_abs, tag = 'smem constant byte address 0x4 - core index']
  #allocation1 [shape = 'u32[144,128]{1,0:T(1,128)}', space=vmem, size = 0x12000, scoped, tag = 'internal scratch']
  #allocation2 [shape = 'bf16[640,64]{1,0:T(16,128)(2,1)}', space=vmem, size = 0x28000, scoped, tag = 'scratch operand']
  #allocation3 [shape = 'bf16[640,64]{1,0:T(16,128)(2,1)}', space=vmem, size = 0x28000, scoped, tag = 'scratch operand']
  #allocation4 [shape = 'f32[128,64]{1,0:T(8,128)}', space=vmem, size = 0x10000, scoped, tag = 'scratch operand']
  %s0 = inlined_call_operand.hbm [shape: bf16[640,640], index: 0, kind: input, shape index: {}]
  %s1 = inlined_call_operand.vmem [shape: bf16[640,64], index: 1, kind: input, shape index: {}]
  %s2 = inlined_call_operand.vmem [shape: f32[2,640,64], index: 2, kind: output, shape index: {}]
  %s3 = sld [smem:[#allocation0]]
  $region65: #{tpu_custom_call.1} parent=0
    _
  %s5 = ssub.s32 1, %s3
  %s6 = scalar_select 0, %s5, %s3
  $region1: #{tpu_custom_call.1} parent=0
    #allocation5 [shape = 'u8[65536]{0}', space=vmem, size = 0x10000, scoped, tag = 'input window, operand 0']
    #allocation6 [shape = 's32[2]{0}', space=sflag, size = 0x8, scoped, tag = 'scoped memory for tpu_custom_call.1']
    %7 = vsyncpa [#allocation6], 0
    %s8 = scalar_lea.sflag [#allocation6], 1
    %9 = vsyncpa %s8, 0
    loop: start=0, step=1, limit=52
    $region2: #{tpu_custom_call.1} parent=1 // loop_pre_header
      _
    $region3: #{tpu_custom_call.1} parent=1 // loop_header
      %s11 = sphi 0, %s15
      %p12 = scmp.ge.s32.totalorder %s11, 52
      %s18 = sphi 0, %s37
      %s19 = sphi 0, %s33
      %s20 = sphi 0, %s29
      %s21 = sphi 0, %s18
      %s22 = sphi 0, %s19
      %s23 = sphi 0, %s20
      %s24 = sphi 0, %s21
      %s25 = sphi 0, %s22
      %s26 = sphi 0, %s23
      %s42 = sphi 0, %s44
      %s45 = sphi 0, %s42
      %s46 = sphi 0, %s45
      %s62 = sphi 0, %s46
      %s66 = sphi 0, %s66
      %s68 = sphi 0, %s66
      %s69 = sphi 0, %s68
      %s83 = sphi 0, %s69
      %s91 = sphi 0, %s93
      %s94 = sphi 0, %s91
      %s95 = sphi 0, %s94
      %s111 = sphi 0, %s95
    $region4: #{tpu_custom_call.1} parent=1 // loop_header_branch
      %14 = sbr.rel (%p12) target = $region8
    $region5: #{tpu_custom_call.1} parent=1 // loop_body
      %s16 = ssub.s32 %s11, 1
      %s17 = ssub.s32 %s11, 2
      %s27 = sadd.s32 1, %s20
      %p28 = scmp.ge.s32.totalorder %s27, 5
      %s29 = scalar_select %p28, 0, %s27
      %s30 = sadd.s32 1, %s19
      %s31 = scalar_select %p28, %s30, %s19
      %p32 = scmp.ge.s32.totalorder %s31, 5
      %s33 = scalar_select %p32, 0, %s31
      %s34 = sadd.s32 1, %s18
      %s35 = scalar_select %p32, %s34, %s18
      %p36 = scmp.ge.s32.totalorder %s35, 2
      %s37 = scalar_select %p36, 0, %s35
      %s38 = ssub.s32 %s19, %s33
      %s39 = ssub.s32 %s20, %s29
      %s40 = sor.u32 %s38, %s39
      %p41 = scmp.eq.s32.totalorder %s40, 0
      %s43 = sadd.s32 %s42, 1
      %s44 = scalar_select %p41, %s42, %s43
      %p47 = pneg %p41
      %p48 = scmp.eq.s32.totalorder %s11, 49
      %p49 = por %p47, %p48
      %p50 = scmp.ne.s32.totalorder %s42, %s45
      %p51 = scmp.eq.s32.totalorder %s11, 0
      %p52 = por %p50, %p51
      %p53 = scmp.ne.s32.totalorder %s42, %s45
      %p54 = scmp.eq.s32.totalorder %s16, 49
      %p55 = por %p53, %p54
      %p56 = scmp.ne.s32.totalorder %s45, %s46
      %p57 = scmp.eq.s32.totalorder %s16, 0
      %p58 = por %p56, %p57
      %p59 = scmp.ne.s32.totalorder %s45, %s46
      %p60 = scmp.eq.s32.totalorder %s17, 49
      %p61 = por %p59, %p60
      %p63 = scmp.ne.s32.totalorder %s46, %s62
      %p64 = scmp.eq.s32.totalorder %s17, 0
      %p65 = por %p63, %p64
      %s67 = sadd.s32 %s66, 1
      %p70 = scmp.eq.s32.totalorder %s11, 49
      %p71 = scmp.ne.s32.totalorder %s66, %s68
      %p72 = scmp.eq.s32.totalorder %s11, 0
      %p73 = por %p71, %p72
      %p74 = scmp.ne.s32.totalorder %s66, %s68
      %p75 = scmp.eq.s32.totalorder %s16, 49
      %p76 = por %p74, %p75
      %p77 = scmp.ne.s32.totalorder %s68, %s69
      %p78 = scmp.eq.s32.totalorder %s16, 0
      %p79 = por %p77, %p78
      %p80 = scmp.ne.s32.totalorder %s68, %s69
      %p81 = scmp.eq.s32.totalorder %s17, 49
      %p82 = por %p80, %p81
      %p84 = scmp.ne.s32.totalorder %s69, %s83
      %p85 = scmp.eq.s32.totalorder %s17, 0
      %p86 = por %p84, %p85
      %s87 = ssub.s32 %s18, %s37
      %s88 = ssub.s32 %s19, %s33
      %s89 = sor.u32 %s87, %s88
      %p90 = scmp.eq.s32.totalorder %s89, 0
      %s92 = sadd.s32 %s91, 1
      %s93 = scalar_select %p90, %s91, %s92
      %p96 = pneg %p90
      %p97 = scmp.eq.s32.totalorder %s11, 49
      %p98 = por %p96, %p97
      %p99 = scmp.ne.s32.totalorder %s91, %s94
      %p100 = scmp.eq.s32.totalorder %s11, 0
      %p101 = por %p99, %p100
      %p102 = scmp.ne.s32.totalorder %s91, %s94
      %p103 = scmp.eq.s32.totalorder %s16, 49
      %p104 = por %p102, %p103
      %p105 = scmp.ne.s32.totalorder %s94, %s95
      %p106 = scmp.eq.s32.totalorder %s16, 0
      %p107 = por %p105, %p106
      %p108 = scmp.ne.s32.totalorder %s94, %s95
      %p109 = scmp.eq.s32.totalorder %s17, 49
      %p110 = por %p108, %p109
      %p112 = scmp.ne.s32.totalorder %s95, %s111
      %p113 = scmp.eq.s32.totalorder %s17, 0
      %p114 = por %p112, %p113
      %p115 = scmp.le.s32.totalorder 1, %s11
      %p116 = scmp.lt.s32.totalorder %s11, 51
      %p117 = pnand %p115, %p116
      %p118 = pneg %p117
      // Predicated region
      $region9: #{tpu_custom_call.1} parent=5 // pred_check
        _
      $region10: #{tpu_custom_call.1} parent=5 // pred_check_branch
        %120 = sbr.rel (%p117) target = $region12
      $region11: #{tpu_custom_call.1} parent=5 // pred_region
        %s121 = ssub.s32 %s11, 1
        // Predicated region
        $region13: #{tpu_custom_call.1} parent=11 // pred_check
          %p122 = pneg %p79
        $region14: #{tpu_custom_call.1} parent=11 // pred_check_branch
          %124 = sbr.rel (%p122) target = $region16
        $region15: #{tpu_custom_call.1} parent=11 // pred_region
          _
        $region16: #{tpu_custom_call.1} parent=11 // pred_fallthru
          _
      $region12: #{tpu_custom_call.1} parent=5 // pred_fallthru
        _
      %p125 = scmp.lt.s32.totalorder %s11, 50
      // Predicated region
      $region17: #{tpu_custom_call.1} parent=5 // pred_check
        %p126 = pneg %p125
      $region18: #{tpu_custom_call.1} parent=5 // pred_check_branch
        %128 = sbr.rel (%p126) target = $region20
      $region19: #{tpu_custom_call.1} parent=5 // pred_region
        // Predicated region
        $region21: #{tpu_custom_call.1} parent=19 // pred_check
          %p129 = pneg %p52
        $region22: #{tpu_custom_call.1} parent=19 // pred_check_branch
          %131 = sbr.rel (%p129) target = $region24
        $region23: #{tpu_custom_call.1} parent=19 // pred_region
          %s132 = sand.u32 %s42, 1
          %s133 = scalar_lea.sflag [#allocation6], %s132
          %s134 = sand.u32 %s42, 1
          %s135 = smul.addr %s134, 64
          %s136 = scalar_lea.vmem [#allocation5], %s135
          %s137 = smul.u32 16, %s19
          %s139 = ssub.s32 1024, 1024
          %140 = vsyncadd %s133, %s139
          %s141 = smul.addr %s137, 5
          %s142 = sadd.s32 %s20, %s141
          %s143 = smul.addr %s142, 64
          %s144 = scalar_lea.hbm %s0, %s143
          %s145 = sshll.u32 %s136, 4
          %s146 = int_to_ptr.vmem [resolvable:$true] %s145
          %151 = dma.hbm_to_vmem [thread:$0]  %s144, 1024, %s146, %s133, 320, 64, 4
        $region24: #{tpu_custom_call.1} parent=19 // pred_fallthru
          _
      $region20: #{tpu_custom_call.1} parent=5 // pred_fallthru
        _
      %p152 = scmp.le.s32.totalorder 1, %s11
      %p153 = scmp.lt.s32.totalorder %s11, 51
      %p154 = pnand %p152, %p153
      %p155 = pneg %p154
      // Predicated region
      $region25: #{tpu_custom_call.1} parent=5 // pred_check
        _
      $region26: #{tpu_custom_call.1} parent=5 // pred_check_branch
        %157 = sbr.rel (%p154) target = $region28
      $region27: #{tpu_custom_call.1} parent=5 // pred_region
        %s158 = ssub.s32 %s11, 1
        %s159 = sand.u32 %s45, 1
        %s160 = scalar_lea.sflag [#allocation6], %s159
        %s161 = sand.u32 %s45, 1
        %s162 = smul.addr %s161, 64
        %s163 = scalar_lea.vmem [#allocation5], %s162
        // Predicated region
        $region29: #{tpu_custom_call.1} parent=27 // pred_check
          %p164 = pneg %p58
        $region30: #{tpu_custom_call.1} parent=27 // pred_check_branch
          %166 = sbr.rel (%p164) target = $region32
        $region31: #{tpu_custom_call.1} parent=27 // pred_region
          %167 = dma.done %s160, 1024
        $region32: #{tpu_custom_call.1} parent=27 // pred_fallthru
          _
        %s168 = sand.u32 %s45, 1
        %s169 = scalar_lea.sflag [#allocation6], %s168
        %s170 = sand.u32 %s45, 1
        %s171 = smul.addr %s170, 64
        %s172 = scalar_lea.vmem [#allocation5], %s171
        %p173 = pneg %p58
        %p174 = pneg %p55
        %p175 = pneg %p79
        %p176 = pneg %p76
        %p177 = pneg %p107
        %p178 = pneg %p104
        %s179 = smul.u32 16, %s22
        %p180 = scmp.lt.s32.totalorder %s21, 1
        %s181 = scalar_select %p180, %s21, 1
        %p182 = scmp.lt.s32.totalorder %s179, 79
        %s183 = scalar_select %p182, %s179, 79
        %s184 = smul.addr %s181, 80
        %s185 = sadd.s32 %s183, %s184
        %s186 = smul.addr %s185, 8
        %s187 = scalar_lea.vmem %s2, %s186
        %s188 = smul.u32 16, %s22
        %s189 = smul.u32 16, %s22
        %p190 = scmp.lt.s32.totalorder %s21, 1
        %s191 = scalar_select %p190, %s21, 1
        %p192 = scmp.lt.s32.totalorder %s189, 79
        %s193 = scalar_select %p192, %s189, 79
        %s194 = smul.addr %s191, 80
        %s195 = sadd.s32 %s193, %s194
        %s196 = smul.addr %s195, 8
        %s197 = scalar_lea.vmem %s2, %s196
        %s198 = smul.u32 16, %s22
        %p200 = scmp.eq.s32.totalorder %s21, 0
        %p201 = scmp.eq.s32.totalorder %s22, 0
        %p202 = pnand %p200, %p201
        %p203 = pneg %p202
        %p204 = scmp.eq.s32.totalorder %s23, 0
        %p205 = pnand %p203, %p204
        %p206 = pneg %p205
        // Predicated region
        $region33: #{tpu_custom_call.1} parent=27 // pred_check
          _
        $region34: #{tpu_custom_call.1} parent=27 // pred_check_branch
          %208 = sbr.rel (%p205) target = $region36
        $region35: #{tpu_custom_call.1} parent=27 // pred_region
          %v209 = vld [vmem:[%s1] sm:$0xf]
          %v210 = vld [vmem:[%s1 + $0x4] sm:$0xf]
          %v211 = vld [vmem:[%s1 + $0x8] sm:$0xf]
          %v212 = vld [vmem:[%s1 + $0xc] sm:$0xf]
          %v213 = vld [vmem:[%s1 + $0x10] sm:$0xf]
          %v214 = vld [vmem:[%s1 + $0x14] sm:$0xf]
          %v215 = vld [vmem:[%s1 + $0x18] sm:$0xf]
          %v216 = vld [vmem:[%s1 + $0x1c] sm:$0xf]
          %v217 = vld [vmem:[%s1 + $0x20] sm:$0xf]
          %v218 = vld [vmem:[%s1 + $0x24] sm:$0xf]
          %v219 = vld [vmem:[%s1 + $0x28] sm:$0xf]
          %v220 = vld [vmem:[%s1 + $0x2c] sm:$0xf]
          %v221 = vld [vmem:[%s1 + $0x30] sm:$0xf]
          %v222 = vld [vmem:[%s1 + $0x34] sm:$0xf]
          %v223 = vld [vmem:[%s1 + $0x38] sm:$0xf]
          %v224 = vld [vmem:[%s1 + $0x3c] sm:$0xf]
          %v225 = vld [vmem:[%s1 + $0x40] sm:$0xf]
          %v226 = vld [vmem:[%s1 + $0x44] sm:$0xf]
          %v227 = vld [vmem:[%s1 + $0x48] sm:$0xf]
          %v228 = vld [vmem:[%s1 + $0x4c] sm:$0xf]
          %v229 = vld [vmem:[%s1 + $0x50] sm:$0xf]
          %v230 = vld [vmem:[%s1 + $0x54] sm:$0xf]
          %v231 = vld [vmem:[%s1 + $0x58] sm:$0xf]
          %v232 = vld [vmem:[%s1 + $0x5c] sm:$0xf]
          %v233 = vld [vmem:[%s1 + $0x60] sm:$0xf]
          %v234 = vld [vmem:[%s1 + $0x64] sm:$0xf]
          %v235 = vld [vmem:[%s1 + $0x68] sm:$0xf]
          %v236 = vld [vmem:[%s1 + $0x6c] sm:$0xf]
          %v237 = vld [vmem:[%s1 + $0x70] sm:$0xf]
          %v238 = vld [vmem:[%s1 + $0x74] sm:$0xf]
          %v239 = vld [vmem:[%s1 + $0x78] sm:$0xf]
          %v240 = vld [vmem:[%s1 + $0x7c] sm:$0xf]
          %v241 = vld [vmem:[%s1 + $0x80] sm:$0xf]
          %v242 = vld [vmem:[%s1 + $0x84] sm:$0xf]
          %v243 = vld [vmem:[%s1 + $0x88] sm:$0xf]
          %v244 = vld [vmem:[%s1 + $0x8c] sm:$0xf]
          %v245 = vld [vmem:[%s1 + $0x90] sm:$0xf]
          %v246 = vld [vmem:[%s1 + $0x94] sm:$0xf]
          %v247 = vld [vmem:[%s1 + $0x98] sm:$0xf]
          %v248 = vld [vmem:[%s1 + $0x9c] sm:$0xf]
          %v249 = vld [vmem:[%s1 + $0xa0] sm:$0xf]
          %v250 = vld [vmem:[%s1 + $0xa4] sm:$0xf]
          %v251 = vld [vmem:[%s1 + $0xa8] sm:$0xf]
          %v252 = vld [vmem:[%s1 + $0xac] sm:$0xf]
          %v253 = vld [vmem:[%s1 + $0xb0] sm:$0xf]
          %v254 = vld [vmem:[%s1 + $0xb4] sm:$0xf]
          %v255 = vld [vmem:[%s1 + $0xb8] sm:$0xf]
          %v256 = vld [vmem:[%s1 + $0xbc] sm:$0xf]
          %v257 = vld [vmem:[%s1 + $0xc0] sm:$0xf]
          %v258 = vld [vmem:[%s1 + $0xc4] sm:$0xf]
          %v259 = vld [vmem:[%s1 + $0xc8] sm:$0xf]
          %v260 = vld [vmem:[%s1 + $0xcc] sm:$0xf]
          %v261 = vld [vmem:[%s1 + $0xd0] sm:$0xf]
          %v262 = vld [vmem:[%s1 + $0xd4] sm:$0xf]
          %v263 = vld [vmem:[%s1 + $0xd8] sm:$0xf]
          %v264 = vld [vmem:[%s1 + $0xdc] sm:$0xf]
          %v265 = vld [vmem:[%s1 + $0xe0] sm:$0xf]
          %v266 = vld [vmem:[%s1 + $0xe4] sm:$0xf]
          %v267 = vld [vmem:[%s1 + $0xe8] sm:$0xf]
          %v268 = vld [vmem:[%s1 + $0xec] sm:$0xf]
          %v269 = vld [vmem:[%s1 + $0xf0] sm:$0xf]
          %v270 = vld [vmem:[%s1 + $0xf4] sm:$0xf]
          %v271 = vld [vmem:[%s1 + $0xf8] sm:$0xf]
          %v272 = vld [vmem:[%s1 + $0xfc] sm:$0xf]
          %v273 = vld [vmem:[%s1 + $0x100] sm:$0xf]
          %v274 = vld [vmem:[%s1 + $0x104] sm:$0xf]
          %v275 = vld [vmem:[%s1 + $0x108] sm:$0xf]
          %v276 = vld [vmem:[%s1 + $0x10c] sm:$0xf]
          %v277 = vld [vmem:[%s1 + $0x110] sm:$0xf]
          %v278 = vld [vmem:[%s1 + $0x114] sm:$0xf]
          %v279 = vld [vmem:[%s1 + $0x118] sm:$0xf]
          %v280 = vld [vmem:[%s1 + $0x11c] sm:$0xf]
          %v281 = vld [vmem:[%s1 + $0x120] sm:$0xf]
          %v282 = vld [vmem:[%s1 + $0x124] sm:$0xf]
          %v283 = vld [vmem:[%s1 + $0x128] sm:$0xf]
          %v284 = vld [vmem:[%s1 + $0x12c] sm:$0xf]
          %v285 = vld [vmem:[%s1 + $0x130] sm:$0xf]
          %v286 = vld [vmem:[%s1 + $0x134] sm:$0xf]
          %v287 = vld [vmem:[%s1 + $0x138] sm:$0xf]
          %v288 = vld [vmem:[%s1 + $0x13c] sm:$0xf]
          %v369 = vunpack.c.l.b16 %v209
          %v370 = vunpack.c.l.b16 %v210
          %v371 = vunpack.c.l.b16 %v211
          %v372 = vunpack.c.l.b16 %v212
          %v373 = vunpack.c.l.b16 %v213
          %v374 = vunpack.c.l.b16 %v214
          %v375 = vunpack.c.l.b16 %v215
          %v376 = vunpack.c.l.b16 %v216
          %v377 = vunpack.c.l.b16 %v217
          %v378 = vunpack.c.l.b16 %v218
          %v379 = vunpack.c.l.b16 %v219
          %v380 = vunpack.c.l.b16 %v220
          %v381 = vunpack.c.l.b16 %v221
          %v382 = vunpack.c.l.b16 %v222
          %v383 = vunpack.c.l.b16 %v223
          %v384 = vunpack.c.l.b16 %v224
          %v385 = vunpack.c.l.b16 %v225
          %v386 = vunpack.c.l.b16 %v226
          %v387 = vunpack.c.l.b16 %v227
          %v388 = vunpack.c.l.b16 %v228
          %v389 = vunpack.c.l.b16 %v229
          %v390 = vunpack.c.l.b16 %v230
          %v391 = vunpack.c.l.b16 %v231
          %v392 = vunpack.c.l.b16 %v232
          %v393 = vunpack.c.l.b16 %v233
          %v394 = vunpack.c.l.b16 %v234
          %v395 = vunpack.c.l.b16 %v235
          %v396 = vunpack.c.l.b16 %v236
          %v397 = vunpack.c.l.b16 %v237
          %v398 = vunpack.c.l.b16 %v238
          %v399 = vunpack.c.l.b16 %v239
          %v400 = vunpack.c.l.b16 %v240
          %v401 = vunpack.c.l.b16 %v241
          %v402 = vunpack.c.l.b16 %v242
          %v403 = vunpack.c.l.b16 %v243
          %v404 = vunpack.c.l.b16 %v244
          %v405 = vunpack.c.l.b16 %v245
          %v406 = vunpack.c.l.b16 %v246
          %v407 = vunpack.c.l.b16 %v247
          %v408 = vunpack.c.l.b16 %v248
          %v409 = vunpack.c.l.b16 %v249
          %v410 = vunpack.c.l.b16 %v250
          %v411 = vunpack.c.l.b16 %v251
          %v412 = vunpack.c.l.b16 %v252
          %v413 = vunpack.c.l.b16 %v253
          %v414 = vunpack.c.l.b16 %v254
          %v415 = vunpack.c.l.b16 %v255
          %v416 = vunpack.c.l.b16 %v256
          %v417 = vunpack.c.l.b16 %v257
          %v418 = vunpack.c.l.b16 %v258
          %v419 = vunpack.c.l.b16 %v259
          %v420 = vunpack.c.l.b16 %v260
          %v421 = vunpack.c.l.b16 %v261
          %v422 = vunpack.c.l.b16 %v262
          %v423 = vunpack.c.l.b16 %v263
          %v424 = vunpack.c.l.b16 %v264
          %v425 = vunpack.c.l.b16 %v265
          %v426 = vunpack.c.l.b16 %v266
          %v427 = vunpack.c.l.b16 %v267
          %v428 = vunpack.c.l.b16 %v268
          %v429 = vunpack.c.l.b16 %v269
          %v430 = vunpack.c.l.b16 %v270
          %v431 = vunpack.c.l.b16 %v271
          %v432 = vunpack.c.l.b16 %v272
          %v433 = vunpack.c.l.b16 %v273
          %v434 = vunpack.c.l.b16 %v274
          %v435 = vunpack.c.l.b16 %v275
          %v436 = vunpack.c.l.b16 %v276
          %v437 = vunpack.c.l.b16 %v277
          %v438 = vunpack.c.l.b16 %v278
          %v439 = vunpack.c.l.b16 %v279
          %v440 = vunpack.c.l.b16 %v280
          %v441 = vunpack.c.l.b16 %v281
          %v442 = vunpack.c.l.b16 %v282
          %v443 = vunpack.c.l.b16 %v283
          %v444 = vunpack.c.l.b16 %v284
          %v445 = vunpack.c.l.b16 %v285
          %v446 = vunpack.c.l.b16 %v286
          %v447 = vunpack.c.l.b16 %v287
          %v448 = vunpack.c.l.b16 %v288
          %v449 = vpack.c.b16 %v370, %v369
          %v450 = vpack.c.b16 %v372, %v371
          %v451 = vpack.c.b16 %v374, %v373
          %v452 = vpack.c.b16 %v376, %v375
          %v453 = vpack.c.b16 %v378, %v377
          %v454 = vpack.c.b16 %v380, %v379
          %v455 = vpack.c.b16 %v382, %v381
          %v456 = vpack.c.b16 %v384, %v383
          %v457 = vpack.c.b16 %v386, %v385
          %v458 = vpack.c.b16 %v388, %v387
          %v459 = vpack.c.b16 %v390, %v389
          %v460 = vpack.c.b16 %v392, %v391
          %v461 = vpack.c.b16 %v394, %v393
          %v462 = vpack.c.b16 %v396, %v395
          %v463 = vpack.c.b16 %v398, %v397
          %v464 = vpack.c.b16 %v400, %v399
          %v465 = vpack.c.b16 %v402, %v401
          %v466 = vpack.c.b16 %v404, %v403
          %v467 = vpack.c.b16 %v406, %v405
          %v468 = vpack.c.b16 %v408, %v407
          %v469 = vpack.c.b16 %v410, %v409
          %v470 = vpack.c.b16 %v412, %v411
          %v471 = vpack.c.b16 %v414, %v413
          %v472 = vpack.c.b16 %v416, %v415
          %v473 = vpack.c.b16 %v418, %v417
          %v474 = vpack.c.b16 %v420, %v419
          %v475 = vpack.c.b16 %v422, %v421
          %v476 = vpack.c.b16 %v424, %v423
          %v477 = vpack.c.b16 %v426, %v425
          %v478 = vpack.c.b16 %v428, %v427
          %v479 = vpack.c.b16 %v430, %v429
          %v480 = vpack.c.b16 %v432, %v431
          %v481 = vpack.c.b16 %v434, %v433
          %v482 = vpack.c.b16 %v436, %v435
          %v483 = vpack.c.b16 %v438, %v437
          %v484 = vpack.c.b16 %v440, %v439
          %v485 = vpack.c.b16 %v442, %v441
          %v486 = vpack.c.b16 %v444, %v443
          %v487 = vpack.c.b16 %v446, %v445
          %v488 = vpack.c.b16 %v448, %v447
          %vm529 = vcmask 523264
          %530 = vst.msk [vmem:[#allocation2] sm:$0xff] %vm529, %v449
          %531 = vst.msk [vmem:[#allocation2 + $0x8] sm:$0xff] %vm529, %v450
          %532 = vst.msk [vmem:[#allocation2 + $0x10] sm:$0xff] %vm529, %v451
          %533 = vst.msk [vmem:[#allocation2 + $0x18] sm:$0xff] %vm529, %v452
          %534 = vst.msk [vmem:[#allocation2 + $0x20] sm:$0xff] %vm529, %v453
          %535 = vst.msk [vmem:[#allocation2 + $0x28] sm:$0xff] %vm529, %v454
          %536 = vst.msk [vmem:[#allocation2 + $0x30] sm:$0xff] %vm529, %v455
          %537 = vst.msk [vmem:[#allocation2 + $0x38] sm:$0xff] %vm529, %v456
          %538 = vst.msk [vmem:[#allocation2 + $0x40] sm:$0xff] %vm529, %v457
          %539 = vst.msk [vmem:[#allocation2 + $0x48] sm:$0xff] %vm529, %v458
          %540 = vst.msk [vmem:[#allocation2 + $0x50] sm:$0xff] %vm529, %v459
          %541 = vst.msk [vmem:[#allocation2 + $0x58] sm:$0xff] %vm529, %v460
          %542 = vst.msk [vmem:[#allocation2 + $0x60] sm:$0xff] %vm529, %v461
          %543 = vst.msk [vmem:[#allocation2 + $0x68] sm:$0xff] %vm529, %v462
          %544 = vst.msk [vmem:[#allocation2 + $0x70] sm:$0xff] %vm529, %v463
          %545 = vst.msk [vmem:[#allocation2 + $0x78] sm:$0xff] %vm529, %v464
          %546 = vst.msk [vmem:[#allocation2 + $0x80] sm:$0xff] %vm529, %v465
          %547 = vst.msk [vmem:[#allocation2 + $0x88] sm:$0xff] %vm529, %v466
          %548 = vst.msk [vmem:[#allocation2 + $0x90] sm:$0xff] %vm529, %v467
          %549 = vst.msk [vmem:[#allocation2 + $0x98] sm:$0xff] %vm529, %v468
          %550 = vst.msk [vmem:[#allocation2 + $0xa0] sm:$0xff] %vm529, %v469
          %551 = vst.msk [vmem:[#allocation2 + $0xa8] sm:$0xff] %vm529, %v470
          %552 = vst.msk [vmem:[#allocation2 + $0xb0] sm:$0xff] %vm529, %v471
          %553 = vst.msk [vmem:[#allocation2 + $0xb8] sm:$0xff] %vm529, %v472
          %554 = vst.msk [vmem:[#allocation2 + $0xc0] sm:$0xff] %vm529, %v473
          %555 = vst.msk [vmem:[#allocation2 + $0xc8] sm:$0xff] %vm529, %v474
          %556 = vst.msk [vmem:[#allocation2 + $0xd0] sm:$0xff] %vm529, %v475
          %557 = vst.msk [vmem:[#allocation2 + $0xd8] sm:$0xff] %vm529, %v476
          %558 = vst.msk [vmem:[#allocation2 + $0xe0] sm:$0xff] %vm529, %v477
          %559 = vst.msk [vmem:[#allocation2 + $0xe8] sm:$0xff] %vm529, %v478
          %560 = vst.msk [vmem:[#allocation2 + $0xf0] sm:$0xff] %vm529, %v479
          %561 = vst.msk [vmem:[#allocation2 + $0xf8] sm:$0xff] %vm529, %v480
          %562 = vst.msk [vmem:[#allocation2 + $0x100] sm:$0xff] %vm529, %v481
          %563 = vst.msk [vmem:[#allocation2 + $0x108] sm:$0xff] %vm529, %v482
          %564 = vst.msk [vmem:[#allocation2 + $0x110] sm:$0xff] %vm529, %v483
          %565 = vst.msk [vmem:[#allocation2 + $0x118] sm:$0xff] %vm529, %v484
          %566 = vst.msk [vmem:[#allocation2 + $0x120] sm:$0xff] %vm529, %v485
          %567 = vst.msk [vmem:[#allocation2 + $0x128] sm:$0xff] %vm529, %v486
          %568 = vst.msk [vmem:[#allocation2 + $0x130] sm:$0xff] %vm529, %v487
          %569 = vst.msk [vmem:[#allocation2 + $0x138] sm:$0xff] %vm529, %v488
          %v570 = vld [vmem:[%s1] sm:$0xf]
          %v571 = vld [vmem:[%s1 + $0x4] sm:$0xf]
          %v572 = vld [vmem:[%s1 + $0x8] sm:$0xf]
          %v573 = vld [vmem:[%s1 + $0xc] sm:$0xf]
          %v574 = vld [vmem:[%s1 + $0x10] sm:$0xf]
          %v575 = vld [vmem:[%s1 + $0x14] sm:$0xf]
          %v576 = vld [vmem:[%s1 + $0x18] sm:$0xf]
          %v577 = vld [vmem:[%s1 + $0x1c] sm:$0xf]
          %v578 = vld [vmem:[%s1 + $0x20] sm:$0xf]
          %v579 = vld [vmem:[%s1 + $0x24] sm:$0xf]
          %v580 = vld [vmem:[%s1 + $0x28] sm:$0xf]
          %v581 = vld [vmem:[%s1 + $0x2c] sm:$0xf]
          %v582 = vld [vmem:[%s1 + $0x30] sm:$0xf]
          %v583 = vld [vmem:[%s1 + $0x34] sm:$0xf]
          %v584 = vld [vmem:[%s1 + $0x38] sm:$0xf]
          %v585 = vld [vmem:[%s1 + $0x3c] sm:$0xf]
          %v586 = vld [vmem:[%s1 + $0x40] sm:$0xf]
          %v587 = vld [vmem:[%s1 + $0x44] sm:$0xf]
          %v588 = vld [vmem:[%s1 + $0x48] sm:$0xf]
          %v589 = vld [vmem:[%s1 + $0x4c] sm:$0xf]
          %v590 = vld [vmem:[%s1 + $0x50] sm:$0xf]
          %v591 = vld [vmem:[%s1 + $0x54] sm:$0xf]
          %v592 = vld [vmem:[%s1 + $0x58] sm:$0xf]
          %v593 = vld [vmem:[%s1 + $0x5c] sm:$0xf]
          %v594 = vld [vmem:[%s1 + $0x60] sm:$0xf]
          %v595 = vld [vmem:[%s1 + $0x64] sm:$0xf]
          %v596 = vld [vmem:[%s1 + $0x68] sm:$0xf]
          %v597 = vld [vmem:[%s1 + $0x6c] sm:$0xf]
          %v598 = vld [vmem:[%s1 + $0x70] sm:$0xf]
          %v599 = vld [vmem:[%s1 + $0x74] sm:$0xf]
          %v600 = vld [vmem:[%s1 + $0x78] sm:$0xf]
          %v601 = vld [vmem:[%s1 + $0x7c] sm:$0xf]
          %v602 = vld [vmem:[%s1 + $0x80] sm:$0xf]
          %v603 = vld [vmem:[%s1 + $0x84] sm:$0xf]
          %v604 = vld [vmem:[%s1 + $0x88] sm:$0xf]
          %v605 = vld [vmem:[%s1 + $0x8c] sm:$0xf]
          %v606 = vld [vmem:[%s1 + $0x90] sm:$0xf]
          %v607 = vld [vmem:[%s1 + $0x94] sm:$0xf]
          %v608 = vld [vmem:[%s1 + $0x98] sm:$0xf]
          %v609 = vld [vmem:[%s1 + $0x9c] sm:$0xf]
          %v610 = vld [vmem:[%s1 + $0xa0] sm:$0xf]
          %v611 = vld [vmem:[%s1 + $0xa4] sm:$0xf]
          %v612 = vld [vmem:[%s1 + $0xa8] sm:$0xf]
          %v613 = vld [vmem:[%s1 + $0xac] sm:$0xf]
          %v614 = vld [vmem:[%s1 + $0xb0] sm:$0xf]
          %v615 = vld [vmem:[%s1 + $0xb4] sm:$0xf]
          %v616 = vld [vmem:[%s1 + $0xb8] sm:$0xf]
          %v617 = vld [vmem:[%s1 + $0xbc] sm:$0xf]
          %v618 = vld [vmem:[%s1 + $0xc0] sm:$0xf]
          %v619 = vld [vmem:[%s1 + $0xc4] sm:$0xf]
          %v620 = vld [vmem:[%s1 + $0xc8] sm:$0xf]
          %v621 = vld [vmem:[%s1 + $0xcc] sm:$0xf]
          %v622 = vld [vmem:[%s1 + $0xd0] sm:$0xf]
          %v623 = vld [vmem:[%s1 + $0xd4] sm:$0xf]
          %v624 = vld [vmem:[%s1 + $0xd8] sm:$0xf]
          %v625 = vld [vmem:[%s1 + $0xdc] sm:$0xf]
          %v626 = vld [vmem:[%s1 + $0xe0] sm:$0xf]
          %v627 = vld [vmem:[%s1 + $0xe4] sm:$0xf]
          %v628 = vld [vmem:[%s1 + $0xe8] sm:$0xf]
          %v629 = vld [vmem:[%s1 + $0xec] sm:$0xf]
          %v630 = vld [vmem:[%s1 + $0xf0] sm:$0xf]
          %v631 = vld [vmem:[%s1 + $0xf4] sm:$0xf]
          %v632 = vld [vmem:[%s1 + $0xf8] sm:$0xf]
          %v633 = vld [vmem:[%s1 + $0xfc] sm:$0xf]
          %v634 = vld [vmem:[%s1 + $0x100] sm:$0xf]
          %v635 = vld [vmem:[%s1 + $0x104] sm:$0xf]
          %v636 = vld [vmem:[%s1 + $0x108] sm:$0xf]
          %v637 = vld [vmem:[%s1 + $0x10c] sm:$0xf]
          %v638 = vld [vmem:[%s1 + $0x110] sm:$0xf]
          %v639 = vld [vmem:[%s1 + $0x114] sm:$0xf]
          %v640 = vld [vmem:[%s1 + $0x118] sm:$0xf]
          %v641 = vld [vmem:[%s1 + $0x11c] sm:$0xf]
          %v642 = vld [vmem:[%s1 + $0x120] sm:$0xf]
          %v643 = vld [vmem:[%s1 + $0x124] sm:$0xf]
          %v644 = vld [vmem:[%s1 + $0x128] sm:$0xf]
          %v645 = vld [vmem:[%s1 + $0x12c] sm:$0xf]
          %v646 = vld [vmem:[%s1 + $0x130] sm:$0xf]
          %v647 = vld [vmem:[%s1 + $0x134] sm:$0xf]
          %v648 = vld [vmem:[%s1 + $0x138] sm:$0xf]
          %v649 = vld [vmem:[%s1 + $0x13c] sm:$0xf]
          %v730 = vunpack.c.l.b16 %v570
          %v731 = vunpack.c.l.b16 %v571
          %v732 = vunpack.c.l.b16 %v572
          %v733 = vunpack.c.l.b16 %v573
          %v734 = vunpack.c.l.b16 %v574
          %v735 = vunpack.c.l.b16 %v575
          %v736 = vunpack.c.l.b16 %v576
          %v737 = vunpack.c.l.b16 %v577
          %v738 = vunpack.c.l.b16 %v578
          %v739 = vunpack.c.l.b16 %v579
          %v740 = vunpack.c.l.b16 %v580
          %v741 = vunpack.c.l.b16 %v581
          %v742 = vunpack.c.l.b16 %v582
          %v743 = vunpack.c.l.b16 %v583
          %v744 = vunpack.c.l.b16 %v584
          %v745 = vunpack.c.l.b16 %v585
          %v746 = vunpack.c.l.b16 %v586
          %v747 = vunpack.c.l.b16 %v587
          %v748 = vunpack.c.l.b16 %v588
          %v749 = vunpack.c.l.b16 %v589
          %v750 = vunpack.c.l.b16 %v590
          %v751 = vunpack.c.l.b16 %v591
          %v752 = vunpack.c.l.b16 %v592
          %v753 = vunpack.c.l.b16 %v593
          %v754 = vunpack.c.l.b16 %v594
          %v755 = vunpack.c.l.b16 %v595
          %v756 = vunpack.c.l.b16 %v596
          %v757 = vunpack.c.l.b16 %v597
          %v758 = vunpack.c.l.b16 %v598
          %v759 = vunpack.c.l.b16 %v599
          %v760 = vunpack.c.l.b16 %v600
          %v761 = vunpack.c.l.b16 %v601
          %v762 = vunpack.c.l.b16 %v602
          %v763 = vunpack.c.l.b16 %v603
          %v764 = vunpack.c.l.b16 %v604
          %v765 = vunpack.c.l.b16 %v605
          %v766 = vunpack.c.l.b16 %v606
          %v767 = vunpack.c.l.b16 %v607
          %v768 = vunpack.c.l.b16 %v608
          %v769 = vunpack.c.l.b16 %v609
          %v770 = vunpack.c.l.b16 %v610
          %v771 = vunpack.c.l.b16 %v611
          %v772 = vunpack.c.l.b16 %v612
          %v773 = vunpack.c.l.b16 %v613
          %v774 = vunpack.c.l.b16 %v614
          %v775 = vunpack.c.l.b16 %v615
          %v776 = vunpack.c.l.b16 %v616
          %v777 = vunpack.c.l.b16 %v617
          %v778 = vunpack.c.l.b16 %v618
          %v779 = vunpack.c.l.b16 %v619
          %v780 = vunpack.c.l.b16 %v620
          %v781 = vunpack.c.l.b16 %v621
          %v782 = vunpack.c.l.b16 %v622
          %v783 = vunpack.c.l.b16 %v623
          %v784 = vunpack.c.l.b16 %v624
          %v785 = vunpack.c.l.b16 %v625
          %v786 = vunpack.c.l.b16 %v626
          %v787 = vunpack.c.l.b16 %v627
          %v788 = vunpack.c.l.b16 %v628
          %v789 = vunpack.c.l.b16 %v629
          %v790 = vunpack.c.l.b16 %v630
          %v791 = vunpack.c.l.b16 %v631
          %v792 = vunpack.c.l.b16 %v632
          %v793 = vunpack.c.l.b16 %v633
          %v794 = vunpack.c.l.b16 %v634
          %v795 = vunpack.c.l.b16 %v635
          %v796 = vunpack.c.l.b16 %v636
          %v797 = vunpack.c.l.b16 %v637
          %v798 = vunpack.c.l.b16 %v638
          %v799 = vunpack.c.l.b16 %v639
          %v800 = vunpack.c.l.b16 %v640
          %v801 = vunpack.c.l.b16 %v641
          %v802 = vunpack.c.l.b16 %v642
          %v803 = vunpack.c.l.b16 %v643
          %v804 = vunpack.c.l.b16 %v644
          %v805 = vunpack.c.l.b16 %v645
          %v806 = vunpack.c.l.b16 %v646
          %v807 = vunpack.c.l.b16 %v647
          %v808 = vunpack.c.l.b16 %v648
          %v809 = vunpack.c.l.b16 %v649
          %v810 = vpack.c.b16 %v731, %v730
          %v811 = vpack.c.b16 %v733, %v732
          %v812 = vpack.c.b16 %v735, %v734
          %v813 = vpack.c.b16 %v737, %v736
          %v814 = vpack.c.b16 %v739, %v738
          %v815 = vpack.c.b16 %v741, %v740
          %v816 = vpack.c.b16 %v743, %v742
          %v817 = vpack.c.b16 %v745, %v744
          %v818 = vpack.c.b16 %v747, %v746
          %v819 = vpack.c.b16 %v749, %v748
          %v820 = vpack.c.b16 %v751, %v750
          %v821 = vpack.c.b16 %v753, %v752
          %v822 = vpack.c.b16 %v755, %v754
          %v823 = vpack.c.b16 %v757, %v756
          %v824 = vpack.c.b16 %v759, %v758
          %v825 = vpack.c.b16 %v761, %v760
          %v826 = vpack.c.b16 %v763, %v762
          %v827 = vpack.c.b16 %v765, %v764
          %v828 = vpack.c.b16 %v767, %v766
          %v829 = vpack.c.b16 %v769, %v768
          %v830 = vpack.c.b16 %v771, %v770
          %v831 = vpack.c.b16 %v773, %v772
          %v832 = vpack.c.b16 %v775, %v774
          %v833 = vpack.c.b16 %v777, %v776
          %v834 = vpack.c.b16 %v779, %v778
          %v835 = vpack.c.b16 %v781, %v780
          %v836 = vpack.c.b16 %v783, %v782
          %v837 = vpack.c.b16 %v785, %v784
          %v838 = vpack.c.b16 %v787, %v786
          %v839 = vpack.c.b16 %v789, %v788
          %v840 = vpack.c.b16 %v791, %v790
          %v841 = vpack.c.b16 %v793, %v792
          %v842 = vpack.c.b16 %v795, %v794
          %v843 = vpack.c.b16 %v797, %v796
          %v844 = vpack.c.b16 %v799, %v798
          %v845 = vpack.c.b16 %v801, %v800
          %v846 = vpack.c.b16 %v803, %v802
          %v847 = vpack.c.b16 %v805, %v804
          %v848 = vpack.c.b16 %v807, %v806
          %v849 = vpack.c.b16 %v809, %v808
          %890 = vst.msk [vmem:[#allocation3] sm:$0xff] %vm529, %v810
          %891 = vst.msk [vmem:[#allocation3 + $0x8] sm:$0xff] %vm529, %v811
          %892 = vst.msk [vmem:[#allocation3 + $0x10] sm:$0xff] %vm529, %v812
          %893 = vst.msk [vmem:[#allocation3 + $0x18] sm:$0xff] %vm529, %v813
          %894 = vst.msk [vmem:[#allocation3 + $0x20] sm:$0xff] %vm529, %v814
          %895 = vst.msk [vmem:[#allocation3 + $0x28] sm:$0xff] %vm529, %v815
          %896 = vst.msk [vmem:[#allocation3 + $0x30] sm:$0xff] %vm529, %v816
          %897 = vst.msk [vmem:[#allocation3 + $0x38] sm:$0xff] %vm529, %v817
          %898 = vst.msk [vmem:[#allocation3 + $0x40] sm:$0xff] %vm529, %v818
          %899 = vst.msk [vmem:[#allocation3 + $0x48] sm:$0xff] %vm529, %v819
          %900 = vst.msk [vmem:[#allocation3 + $0x50] sm:$0xff] %vm529, %v820
          %901 = vst.msk [vmem:[#allocation3 + $0x58] sm:$0xff] %vm529, %v821
          %902 = vst.msk [vmem:[#allocation3 + $0x60] sm:$0xff] %vm529, %v822
          %903 = vst.msk [vmem:[#allocation3 + $0x68] sm:$0xff] %vm529, %v823
          %904 = vst.msk [vmem:[#allocation3 + $0x70] sm:$0xff] %vm529, %v824
          %905 = vst.msk [vmem:[#allocation3 + $0x78] sm:$0xff] %vm529, %v825
          %906 = vst.msk [vmem:[#allocation3 + $0x80] sm:$0xff] %vm529, %v826
          %907 = vst.msk [vmem:[#allocation3 + $0x88] sm:$0xff] %vm529, %v827
          %908 = vst.msk [vmem:[#allocation3 + $0x90] sm:$0xff] %vm529, %v828
          %909 = vst.msk [vmem:[#allocation3 + $0x98] sm:$0xff] %vm529, %v829
          %910 = vst.msk [vmem:[#allocation3 + $0xa0] sm:$0xff] %vm529, %v830
          %911 = vst.msk [vmem:[#allocation3 + $0xa8] sm:$0xff] %vm529, %v831
          %912 = vst.msk [vmem:[#allocation3 + $0xb0] sm:$0xff] %vm529, %v832
          %913 = vst.msk [vmem:[#allocation3 + $0xb8] sm:$0xff] %vm529, %v833
          %914 = vst.msk [vmem:[#allocation3 + $0xc0] sm:$0xff] %vm529, %v834
          %915 = vst.msk [vmem:[#allocation3 + $0xc8] sm:$0xff] %vm529, %v835
          %916 = vst.msk [vmem:[#allocation3 + $0xd0] sm:$0xff] %vm529, %v836
          %917 = vst.msk [vmem:[#allocation3 + $0xd8] sm:$0xff] %vm529, %v837
          %918 = vst.msk [vmem:[#allocation3 + $0xe0] sm:$0xff] %vm529, %v838
          %919 = vst.msk [vmem:[#allocation3 + $0xe8] sm:$0xff] %vm529, %v839
          %920 = vst.msk [vmem:[#allocation3 + $0xf0] sm:$0xff] %vm529, %v840
          %921 = vst.msk [vmem:[#allocation3 + $0xf8] sm:$0xff] %vm529, %v841
          %922 = vst.msk [vmem:[#allocation3 + $0x100] sm:$0xff] %vm529, %v842
          %923 = vst.msk [vmem:[#allocation3 + $0x108] sm:$0xff] %vm529, %v843
          %924 = vst.msk [vmem:[#allocation3 + $0x110] sm:$0xff] %vm529, %v844
          %925 = vst.msk [vmem:[#allocation3 + $0x118] sm:$0xff] %vm529, %v845
          %926 = vst.msk [vmem:[#allocation3 + $0x120] sm:$0xff] %vm529, %v846
          %927 = vst.msk [vmem:[#allocation3 + $0x128] sm:$0xff] %vm529, %v847
          %928 = vst.msk [vmem:[#allocation3 + $0x130] sm:$0xff] %vm529, %v848
          %929 = vst.msk [vmem:[#allocation3 + $0x138] sm:$0xff] %vm529, %v849
        $region36: #{tpu_custom_call.1} parent=27 // pred_fallthru
          _
        // Predicated region
        $region37: #{tpu_custom_call.1} parent=27 // pred_check
          %p930 = pneg %p204
        $region38: #{tpu_custom_call.1} parent=27 // pred_check_branch
          %932 = sbr.rel (%p930) target = $region40
        $region39: #{tpu_custom_call.1} parent=27 // pred_region
          %vm933 = vcmask 523264
          %934 = vst.msk [vmem:[#allocation4] sm:$0xff] %vm933, 0.0
          %935 = vst.msk [vmem:[#allocation4 + $0x8] sm:$0xff] %vm933, 0.0
          %936 = vst.msk [vmem:[#allocation4 + $0x10] sm:$0xff] %vm933, 0.0
          %937 = vst.msk [vmem:[#allocation4 + $0x18] sm:$0xff] %vm933, 0.0
          %938 = vst.msk [vmem:[#allocation4 + $0x20] sm:$0xff] %vm933, 0.0
          %939 = vst.msk [vmem:[#allocation4 + $0x28] sm:$0xff] %vm933, 0.0
          %940 = vst.msk [vmem:[#allocation4 + $0x30] sm:$0xff] %vm933, 0.0
          %941 = vst.msk [vmem:[#allocation4 + $0x38] sm:$0xff] %vm933, 0.0
          %942 = vst.msk [vmem:[#allocation4 + $0x40] sm:$0xff] %vm933, 0.0
          %943 = vst.msk [vmem:[#allocation4 + $0x48] sm:$0xff] %vm933, 0.0
          %944 = vst.msk [vmem:[#allocation4 + $0x50] sm:$0xff] %vm933, 0.0
          %945 = vst.msk [vmem:[#allocation4 + $0x58] sm:$0xff] %vm933, 0.0
          %946 = vst.msk [vmem:[#allocation4 + $0x60] sm:$0xff] %vm933, 0.0
          %947 = vst.msk [vmem:[#allocation4 + $0x68] sm:$0xff] %vm933, 0.0
          %948 = vst.msk [vmem:[#allocation4 + $0x70] sm:$0xff] %vm933, 0.0
          %949 = vst.msk [vmem:[#allocation4 + $0x78] sm:$0xff] %vm933, 0.0
        $region40: #{tpu_custom_call.1} parent=27 // pred_fallthru
          _
        %p950 = scmp.lt.s32.totalorder %s21, 0
        %s951 = ssub.s32 0, %s21
        %s952 = scalar_select %p950, %s951, %s21
        %s953 = sand.u32 %s952, 1
        %s954 = ssub.s32 0, %s953
        %s955 = scalar_select %p950, %s954, %s953
        %p956 = scmp.ne.s32.totalorder %s955, 0
        %p957 = scmp.lt.s32.totalorder %s955, 0
        %p958 = pnand %p957, %p956
        %p959 = pneg %p958
        %s960 = sadd.s32 %s955, 2
        %s961 = scalar_select %p959, %s960, %s955
        %p962 = scmp.eq.s32.totalorder %s961, 0
        %s963 = smul.u32 %s23, 128
        %s964 = sshra.s32 %s963, 4
        %s965 = sand.u32 %s963, 15
        %s966 = smul.addr %s964, 8
        %s967 = scalar_lea.vmem [#allocation2], %s966
        %v968 = vld [vmem:[%s967] sm:$0xff]
        %v969 = vld [vmem:[%s967 + $0x8] sm:$0xff]
        %v970 = vld [vmem:[%s967 + $0x10] sm:$0xff]
        %v971 = vld [vmem:[%s967 + $0x18] sm:$0xff]
        %v972 = vld [vmem:[%s967 + $0x20] sm:$0xff]
        %v973 = vld [vmem:[%s967 + $0x28] sm:$0xff]
        %v974 = vld [vmem:[%s967 + $0x30] sm:$0xff]
        %v975 = vld [vmem:[%s967 + $0x38] sm:$0xff]
        %s976 = smul.addr %s964, 8
        %s977 = scalar_lea.vmem [#allocation3], %s976
        %v978 = vld [vmem:[%s977] sm:$0xff]
        %v979 = vld [vmem:[%s977 + $0x8] sm:$0xff]
        %v980 = vld [vmem:[%s977 + $0x10] sm:$0xff]
        %v981 = vld [vmem:[%s977 + $0x18] sm:$0xff]
        %v982 = vld [vmem:[%s977 + $0x20] sm:$0xff]
        %v983 = vld [vmem:[%s977 + $0x28] sm:$0xff]
        %v984 = vld [vmem:[%s977 + $0x30] sm:$0xff]
        %v985 = vld [vmem:[%s977 + $0x38] sm:$0xff]
        %s986 = scalar_select %p962, 1, 0
        %v987 = vstv %s986
        %vm988 = vcmp.eq.s32.totalorder %v987, 1
        %v989 = vsel %vm988, %v968, %v978
        %v990 = vsel %vm988, %v969, %v979
        %v991 = vsel %vm988, %v970, %v980
        %v992 = vsel %vm988, %v971, %v981
        %v993 = vsel %vm988, %v972, %v982
        %v994 = vsel %vm988, %v973, %v983
        %v995 = vsel %vm988, %v974, %v984
        %v996 = vsel %vm988, %v975, %v985
        %v997 = vld [vmem:[#allocation4] sm:$0xff]
        %v998 = vld [vmem:[#allocation4 + $0x8] sm:$0xff]
        %v999 = vld [vmem:[#allocation4 + $0x10] sm:$0xff]
        %v1000 = vld [vmem:[#allocation4 + $0x18] sm:$0xff]
        %v1001 = vld [vmem:[#allocation4 + $0x20] sm:$0xff]
        %v1002 = vld [vmem:[#allocation4 + $0x28] sm:$0xff]
        %v1003 = vld [vmem:[#allocation4 + $0x30] sm:$0xff]
        %v1004 = vld [vmem:[#allocation4 + $0x38] sm:$0xff]
        %v1005 = vld [vmem:[#allocation4 + $0x40] sm:$0xff]
        %v1006 = vld [vmem:[#allocation4 + $0x48] sm:$0xff]
        %v1007 = vld [vmem:[#allocation4 + $0x50] sm:$0xff]
        %v1008 = vld [vmem:[#allocation4 + $0x58] sm:$0xff]
        %v1009 = vld [vmem:[#allocation4 + $0x60] sm:$0xff]
        %v1010 = vld [vmem:[#allocation4 + $0x68] sm:$0xff]
        %v1011 = vld [vmem:[#allocation4 + $0x70] sm:$0xff]
        %v1012 = vld [vmem:[#allocation4 + $0x78] sm:$0xff]
        %v1013 = vld [vmem:[%s163] sm:$0xf]
        %v1014 = vld [vmem:[%s163 + $0x4] sm:$0xf]
        %v1015 = vld [vmem:[%s163 + $0x8] sm:$0xf]
        %v1016 = vld [vmem:[%s163 + $0xc] sm:$0xf]
        %v1017 = vld [vmem:[%s163 + $0x10] sm:$0xf]
        %v1018 = vld [vmem:[%s163 + $0x14] sm:$0xf]
        %v1019 = vld [vmem:[%s163 + $0x18] sm:$0xf]
        %v1020 = vld [vmem:[%s163 + $0x1c] sm:$0xf]
        %v1021 = vld [vmem:[%s163 + $0x20] sm:$0xf]
        %v1022 = vld [vmem:[%s163 + $0x24] sm:$0xf]
        %v1023 = vld [vmem:[%s163 + $0x28] sm:$0xf]
        %v1024 = vld [vmem:[%s163 + $0x2c] sm:$0xf]
        %v1025 = vld [vmem:[%s163 + $0x30] sm:$0xf]
        %v1026 = vld [vmem:[%s163 + $0x34] sm:$0xf]
        %v1027 = vld [vmem:[%s163 + $0x38] sm:$0xf]
        %v1028 = vld [vmem:[%s163 + $0x3c] sm:$0xf]
        %v1045 = vunpack.c.l.b16 %v1013
        %v1046 = vunpack.c.l.b16 %v1014
        %v1047 = vunpack.c.l.b16 %v1015
        %v1048 = vunpack.c.l.b16 %v1016
        %v1049 = vunpack.c.l.b16 %v1017
        %v1050 = vunpack.c.l.b16 %v1018
        %v1051 = vunpack.c.l.b16 %v1019
        %v1052 = vunpack.c.l.b16 %v1020
        %v1053 = vunpack.c.l.b16 %v1021
        %v1054 = vunpack.c.l.b16 %v1022
        %v1055 = vunpack.c.l.b16 %v1023
        %v1056 = vunpack.c.l.b16 %v1024
        %v1057 = vunpack.c.l.b16 %v1025
        %v1058 = vunpack.c.l.b16 %v1026
        %v1059 = vunpack.c.l.b16 %v1027
        %v1060 = vunpack.c.l.b16 %v1028
        %v1061 = vpack.c.b16 %v1046, %v1045
        %v1062 = vpack.c.b16 %v1048, %v1047
        %v1063 = vpack.c.b16 %v1050, %v1049
        %v1064 = vpack.c.b16 %v1052, %v1051
        %v1065 = vpack.c.b16 %v1054, %v1053
        %v1066 = vpack.c.b16 %v1056, %v1055
        %v1067 = vpack.c.b16 %v1058, %v1057
        %v1068 = vpack.c.b16 %v1060, %v1059
        %1077 = vmatprep.subr.bf16.mxu0 0
        %1078 = vmatpush1.bf16.msra.mxu0 %v989
        %1079 = vmatprep.subr.bf16.mxu0 0
        %1080 = vmatpush1.bf16.msra.mxu0 %v990
        %1081 = vmatprep.subr.bf16.mxu0 0
        %1082 = vmatpush1.bf16.msra.mxu0 %v991
        %1083 = vmatprep.subr.bf16.mxu0 0
        %1084 = vmatpush1.bf16.msra.mxu0 %v992
        %1085 = vmatprep.subr.bf16.mxu0 0
        %1086 = vmatpush1.bf16.msra.mxu0 %v993
        %1087 = vmatprep.subr.bf16.mxu0 0
        %1088 = vmatpush1.bf16.msra.mxu0 %v994
        %1089 = vmatprep.subr.bf16.mxu0 0
        %1090 = vmatpush1.bf16.msra.mxu0 %v995
        %1091 = vmatprep.subr.bf16.mxu0 0
        %1092 = vmatpush1.bf16.msra.mxu0 %v996
        %1093 = vmatprep.subr.bf16.mxu0 0
        %1094 = vmatpush1.bf16.msra.mxu0 0
        %1095 = vmatprep.subr.bf16.mxu0 0
        %1096 = vmatpush1.bf16.msra.mxu0 0
        %1097 = vmatprep.subr.bf16.mxu0 0
        %1098 = vmatpush1.bf16.msra.mxu0 0
        %1099 = vmatprep.subr.bf16.mxu0 0
        %1100 = vmatpush1.bf16.msra.mxu0 0
        %1101 = vmatprep.subr.bf16.mxu0 0
        %1102 = vmatpush1.bf16.msra.mxu0 0
        %1103 = vmatprep.subr.bf16.mxu0 0
        %1104 = vmatpush1.bf16.msra.mxu0 0
        %1105 = vmatprep.subr.bf16.mxu0 0
        %1106 = vmatpush1.bf16.msra.mxu0 0
        %1107 = vmatprep.subr.bf16.mxu0 0
        %1108 = vmatpush1.bf16.msra.mxu0 0
        %1109 = vmatprep.mubr.bf16.mxu0 0
        %1110 = vmatmul.mubr.bf16.gmra.mrb[0].mxu0 %v1061
        %v1111 = vpop.f32.mrb[0].mxu0
        %v1112 = vadd.f32 0.0, %v1111
        %v1113 = vpop.f32.mrb[0].mxu0
        %v1114 = vpop.f32.mrb[0].mxu0
        %v1115 = vadd.f32 0.0, %v1114
        %v1116 = vpop.f32.mrb[0].mxu0
        %1117 = vmatprep.mubr.bf16.mxu0 0
        %1118 = vmatmul.mubr.bf16.gmra.mrb[0].mxu0 %v1062
        %v1119 = vpop.f32.mrb[0].mxu0
        %v1120 = vadd.f32 0.0, %v1119
        %v1121 = vpop.f32.mrb[0].mxu0
        %v1122 = vpop.f32.mrb[0].mxu0
        %v1123 = vadd.f32 0.0, %v1122
        %v1124 = vpop.f32.mrb[0].mxu0
        %1125 = vmatprep.mubr.bf16.mxu0 0
        %1126 = vmatmul.mubr.bf16.gmra.mrb[0].mxu0 %v1063
        %v1127 = vpop.f32.mrb[0].mxu0
        %v1128 = vadd.f32 0.0, %v1127
        %v1129 = vpop.f32.mrb[0].mxu0
        %v1130 = vpop.f32.mrb[0].mxu0
        %v1131 = vadd.f32 0.0, %v1130
        %v1132 = vpop.f32.mrb[0].mxu0
        %1133 = vmatprep.mubr.bf16.mxu0 0
        %1134 = vmatmul.mubr.bf16.gmra.mrb[0].mxu0 %v1064
        %v1135 = vpop.f32.mrb[0].mxu0
        %v1136 = vadd.f32 0.0, %v1135
        %v1137 = vpop.f32.mrb[0].mxu0
        %v1138 = vpop.f32.mrb[0].mxu0
        %v1139 = vadd.f32 0.0, %v1138
        %v1140 = vpop.f32.mrb[0].mxu0
        %1141 = vmatprep.mubr.bf16.mxu0 0
        %1142 = vmatmul.mubr.bf16.gmra.mrb[0].mxu0 %v1065
        %v1143 = vpop.f32.mrb[0].mxu0
        %v1144 = vadd.f32 0.0, %v1143
        %v1145 = vpop.f32.mrb[0].mxu0
        %v1146 = vpop.f32.mrb[0].mxu0
        %v1147 = vadd.f32 0.0, %v1146
        %v1148 = vpop.f32.mrb[0].mxu0
        %1149 = vmatprep.mubr.bf16.mxu0 0
        %1150 = vmatmul.mubr.bf16.gmra.mrb[0].mxu0 %v1066
        %v1151 = vpop.f32.mrb[0].mxu0
        %v1152 = vadd.f32 0.0, %v1151
        %v1153 = vpop.f32.mrb[0].mxu0
        %v1154 = vpop.f32.mrb[0].mxu0
        %v1155 = vadd.f32 0.0, %v1154
        %v1156 = vpop.f32.mrb[0].mxu0
        %1157 = vmatprep.mubr.bf16.mxu0 0
        %1158 = vmatmul.mubr.bf16.gmra.mrb[0].mxu0 %v1067
        %v1159 = vpop.f32.mrb[0].mxu0
        %v1160 = vadd.f32 0.0, %v1159
        %v1161 = vpop.f32.mrb[0].mxu0
        %v1162 = vpop.f32.mrb[0].mxu0
        %v1163 = vadd.f32 0.0, %v1162
        %v1164 = vpop.f32.mrb[0].mxu0
        %1165 = vmatprep.mubr.bf16.mxu0 0
        %1166 = vmatmul.mubr.bf16.gmra.mrb[0].mxu0 %v1068
        %v1167 = vpop.f32.mrb[0].mxu0
        %v1168 = vadd.f32 0.0, %v1167
        %v1169 = vpop.f32.mrb[0].mxu0
        %v1170 = vpop.f32.mrb[0].mxu0
        %v1171 = vadd.f32 0.0, %v1170
        %v1172 = vpop.f32.mrb[0].mxu0
        %1173 = vdwg.mxu0
        %v1174 = vadd.f32 %v997, %v1112
        %v1175 = vadd.f32 %v998, %v1115
        %v1176 = vadd.f32 %v999, %v1120
        %v1177 = vadd.f32 %v1000, %v1123
        %v1178 = vadd.f32 %v1001, %v1128
        %v1179 = vadd.f32 %v1002, %v1131
        %v1180 = vadd.f32 %v1003, %v1136
        %v1181 = vadd.f32 %v1004, %v1139
        %v1182 = vadd.f32 %v1005, %v1144
        %v1183 = vadd.f32 %v1006, %v1147
        %v1184 = vadd.f32 %v1007, %v1152
        %v1185 = vadd.f32 %v1008, %v1155
        %v1186 = vadd.f32 %v1009, %v1160
        %v1187 = vadd.f32 %v1010, %v1163
        %v1188 = vadd.f32 %v1011, %v1168
        %v1189 = vadd.f32 %v1012, %v1171
        %vm1190 = vcmask 523264
        %1191 = vst.msk [vmem:[#allocation4] sm:$0xff] %vm1190, %v1174
        %1192 = vst.msk [vmem:[#allocation4 + $0x8] sm:$0xff] %vm1190, %v1175
        %1193 = vst.msk [vmem:[#allocation4 + $0x10] sm:$0xff] %vm1190, %v1176
        %1194 = vst.msk [vmem:[#allocation4 + $0x18] sm:$0xff] %vm1190, %v1177
        %1195 = vst.msk [vmem:[#allocation4 + $0x20] sm:$0xff] %vm1190, %v1178
        %1196 = vst.msk [vmem:[#allocation4 + $0x28] sm:$0xff] %vm1190, %v1179
        %1197 = vst.msk [vmem:[#allocation4 + $0x30] sm:$0xff] %vm1190, %v1180
        %1198 = vst.msk [vmem:[#allocation4 + $0x38] sm:$0xff] %vm1190, %v1181
        %1199 = vst.msk [vmem:[#allocation4 + $0x40] sm:$0xff] %vm1190, %v1182
        %1200 = vst.msk [vmem:[#allocation4 + $0x48] sm:$0xff] %vm1190, %v1183
        %1201 = vst.msk [vmem:[#allocation4 + $0x50] sm:$0xff] %vm1190, %v1184
        %1202 = vst.msk [vmem:[#allocation4 + $0x58] sm:$0xff] %vm1190, %v1185
        %1203 = vst.msk [vmem:[#allocation4 + $0x60] sm:$0xff] %vm1190, %v1186
        %1204 = vst.msk [vmem:[#allocation4 + $0x68] sm:$0xff] %vm1190, %v1187
        %1205 = vst.msk [vmem:[#allocation4 + $0x70] sm:$0xff] %vm1190, %v1188
        %1206 = vst.msk [vmem:[#allocation4 + $0x78] sm:$0xff] %vm1190, %v1189
        %p1207 = scmp.eq.s32.totalorder %s23, 4
        %p1208 = scmp.lt.s32.totalorder %s21, 1
        %s1209 = smul.u32 %s22, 128
        // Predicated region
        $region41: #{tpu_custom_call.1} parent=27 // pred_check
          %p1210 = pneg %p1207
        $region42: #{tpu_custom_call.1} parent=27 // pred_check_branch
          %1212 = sbr.rel (%p1210) target = $region44
        $region43: #{tpu_custom_call.1} parent=27 // pred_region
          %v1213 = vld [vmem:[#allocation4] sm:$0xff]
          %v1214 = vld [vmem:[#allocation4 + $0x8] sm:$0xff]
          %v1215 = vld [vmem:[#allocation4 + $0x10] sm:$0xff]
          %v1216 = vld [vmem:[#allocation4 + $0x18] sm:$0xff]
          %v1217 = vld [vmem:[#allocation4 + $0x20] sm:$0xff]
          %v1218 = vld [vmem:[#allocation4 + $0x28] sm:$0xff]
          %v1219 = vld [vmem:[#allocation4 + $0x30] sm:$0xff]
          %v1220 = vld [vmem:[#allocation4 + $0x38] sm:$0xff]
          %v1221 = vld [vmem:[#allocation4 + $0x40] sm:$0xff]
          %v1222 = vld [vmem:[#allocation4 + $0x48] sm:$0xff]
          %v1223 = vld [vmem:[#allocation4 + $0x50] sm:$0xff]
          %v1224 = vld [vmem:[#allocation4 + $0x58] sm:$0xff]
          %v1225 = vld [vmem:[#allocation4 + $0x60] sm:$0xff]
          %v1226 = vld [vmem:[#allocation4 + $0x68] sm:$0xff]
          %v1227 = vld [vmem:[#allocation4 + $0x70] sm:$0xff]
          %v1228 = vld [vmem:[#allocation4 + $0x78] sm:$0xff]
          %1229 = vst.msk [vmem:[%s197] sm:$0xff] %vm1190, %v1213
          %1230 = vst.msk [vmem:[%s197 + $0x8] sm:$0xff] %vm1190, %v1214
          %1231 = vst.msk [vmem:[%s197 + $0x10] sm:$0xff] %vm1190, %v1215
          %1232 = vst.msk [vmem:[%s197 + $0x18] sm:$0xff] %vm1190, %v1216
          %1233 = vst.msk [vmem:[%s197 + $0x20] sm:$0xff] %vm1190, %v1217
          %1234 = vst.msk [vmem:[%s197 + $0x28] sm:$0xff] %vm1190, %v1218
          %1235 = vst.msk [vmem:[%s197 + $0x30] sm:$0xff] %vm1190, %v1219
          %1236 = vst.msk [vmem:[%s197 + $0x38] sm:$0xff] %vm1190, %v1220
          %1237 = vst.msk [vmem:[%s197 + $0x40] sm:$0xff] %vm1190, %v1221
          %1238 = vst.msk [vmem:[%s197 + $0x48] sm:$0xff] %vm1190, %v1222
          %1239 = vst.msk [vmem:[%s197 + $0x50] sm:$0xff] %vm1190, %v1223
          %1240 = vst.msk [vmem:[%s197 + $0x58] sm:$0xff] %vm1190, %v1224
          %1241 = vst.msk [vmem:[%s197 + $0x60] sm:$0xff] %vm1190, %v1225
          %1242 = vst.msk [vmem:[%s197 + $0x68] sm:$0xff] %vm1190, %v1226
          %1243 = vst.msk [vmem:[%s197 + $0x70] sm:$0xff] %vm1190, %v1227
          %1244 = vst.msk [vmem:[%s197 + $0x78] sm:$0xff] %vm1190, %v1228
        $region44: #{tpu_custom_call.1} parent=27 // pred_fallthru
          _
        %p1245 = pnand %p1207, %p1208
        %p1246 = pneg %p1245
        %p1247 = pnand %p1246, %p962
        %p1248 = pneg %p1247
        // Predicated region
        $region45: #{tpu_custom_call.1} parent=27 // pred_check
          _
        $region46: #{tpu_custom_call.1} parent=27 // pred_check_branch
          %1250 = sbr.rel (%p1247) target = $region48
        $region47: #{tpu_custom_call.1} parent=27 // pred_region
          %v1251 = vld [vmem:[#allocation4] sm:$0xff]
          %v1252 = vld [vmem:[#allocation4 + $0x8] sm:$0xff]
          %v1253 = vld [vmem:[#allocation4 + $0x10] sm:$0xff]
          %v1254 = vld [vmem:[#allocation4 + $0x18] sm:$0xff]
          %v1255 = vld [vmem:[#allocation4 + $0x20] sm:$0xff]
          %v1256 = vld [vmem:[#allocation4 + $0x28] sm:$0xff]
          %v1257 = vld [vmem:[#allocation4 + $0x30] sm:$0xff]
          %v1258 = vld [vmem:[#allocation4 + $0x38] sm:$0xff]
          %v1259 = vld [vmem:[#allocation4 + $0x40] sm:$0xff]
          %v1260 = vld [vmem:[#allocation4 + $0x48] sm:$0xff]
          %v1261 = vld [vmem:[#allocation4 + $0x50] sm:$0xff]
          %v1262 = vld [vmem:[#allocation4 + $0x58] sm:$0xff]
          %v1263 = vld [vmem:[#allocation4 + $0x60] sm:$0xff]
          %v1264 = vld [vmem:[#allocation4 + $0x68] sm:$0xff]
          %v1265 = vld [vmem:[#allocation4 + $0x70] sm:$0xff]
          %v1266 = vld [vmem:[#allocation4 + $0x78] sm:$0xff]
          %v1267 = vpack.c.bf16 %v1252, %v1251
          %v1268 = vpack.c.bf16 %v1254, %v1253
          %v1269 = vpack.c.bf16 %v1256, %v1255
          %v1270 = vpack.c.bf16 %v1258, %v1257
          %v1271 = vpack.c.bf16 %v1260, %v1259
          %v1272 = vpack.c.bf16 %v1262, %v1261
          %v1273 = vpack.c.bf16 %v1264, %v1263
          %v1274 = vpack.c.bf16 %v1266, %v1265
          %s1275 = sshra.s32 %s1209, 4
          %s1276 = sand.u32 %s1209, 15
          %s1277 = smul.addr %s1275, 8
          %s1278 = scalar_lea.vmem [#allocation3], %s1277
          %1279 = vst.msk [vmem:[%s1278] sm:$0xff] %vm1190, %v1267
          %1280 = vst.msk [vmem:[%s1278 + $0x8] sm:$0xff] %vm1190, %v1268
          %1281 = vst.msk [vmem:[%s1278 + $0x10] sm:$0xff] %vm1190, %v1269
          %1282 = vst.msk [vmem:[%s1278 + $0x18] sm:$0xff] %vm1190, %v1270
          %1283 = vst.msk [vmem:[%s1278 + $0x20] sm:$0xff] %vm1190, %v1271
          %1284 = vst.msk [vmem:[%s1278 + $0x28] sm:$0xff] %vm1190, %v1272
          %1285 = vst.msk [vmem:[%s1278 + $0x30] sm:$0xff] %vm1190, %v1273
          %1286 = vst.msk [vmem:[%s1278 + $0x38] sm:$0xff] %vm1190, %v1274
        $region48: #{tpu_custom_call.1} parent=27 // pred_fallthru
          _
        %p1287 = scmp.ne.s32.totalorder %s961, 0
        %p1288 = pnand %p1246, %p1287
        %p1289 = pneg %p1288
        // Predicated region
        $region49: #{tpu_custom_call.1} parent=27 // pred_check
          _
        $region50: #{tpu_custom_call.1} parent=27 // pred_check_branch
          %1291 = sbr.rel (%p1288) target = $region52
        $region51: #{tpu_custom_call.1} parent=27 // pred_region
          %v1292 = vld [vmem:[#allocation4] sm:$0xff]
          %v1293 = vld [vmem:[#allocation4 + $0x8] sm:$0xff]
          %v1294 = vld [vmem:[#allocation4 + $0x10] sm:$0xff]
          %v1295 = vld [vmem:[#allocation4 + $0x18] sm:$0xff]
          %v1296 = vld [vmem:[#allocation4 + $0x20] sm:$0xff]
          %v1297 = vld [vmem:[#allocation4 + $0x28] sm:$0xff]
          %v1298 = vld [vmem:[#allocation4 + $0x30] sm:$0xff]
          %v1299 = vld [vmem:[#allocation4 + $0x38] sm:$0xff]
          %v1300 = vld [vmem:[#allocation4 + $0x40] sm:$0xff]
          %v1301 = vld [vmem:[#allocation4 + $0x48] sm:$0xff]
          %v1302 = vld [vmem:[#allocation4 + $0x50] sm:$0xff]
          %v1303 = vld [vmem:[#allocation4 + $0x58] sm:$0xff]
          %v1304 = vld [vmem:[#allocation4 + $0x60] sm:$0xff]
          %v1305 = vld [vmem:[#allocation4 + $0x68] sm:$0xff]
          %v1306 = vld [vmem:[#allocation4 + $0x70] sm:$0xff]
          %v1307 = vld [vmem:[#allocation4 + $0x78] sm:$0xff]
          %v1308 = vpack.c.bf16 %v1293, %v1292
          %v1309 = vpack.c.bf16 %v1295, %v1294
          %v1310 = vpack.c.bf16 %v1297, %v1296
          %v1311 = vpack.c.bf16 %v1299, %v1298
          %v1312 = vpack.c.bf16 %v1301, %v1300
          %v1313 = vpack.c.bf16 %v1303, %v1302
          %v1314 = vpack.c.bf16 %v1305, %v1304
          %v1315 = vpack.c.bf16 %v1307, %v1306
          %s1316 = sshra.s32 %s1209, 4
          %s1317 = sand.u32 %s1209, 15
          %s1318 = smul.addr %s1316, 8
          %s1319 = scalar_lea.vmem [#allocation2], %s1318
          %1320 = vst.msk [vmem:[%s1319] sm:$0xff] %vm1190, %v1308
          %1321 = vst.msk [vmem:[%s1319 + $0x8] sm:$0xff] %vm1190, %v1309
          %1322 = vst.msk [vmem:[%s1319 + $0x10] sm:$0xff] %vm1190, %v1310
          %1323 = vst.msk [vmem:[%s1319 + $0x18] sm:$0xff] %vm1190, %v1311
          %1324 = vst.msk [vmem:[%s1319 + $0x20] sm:$0xff] %vm1190, %v1312
          %1325 = vst.msk [vmem:[%s1319 + $0x28] sm:$0xff] %vm1190, %v1313
          %1326 = vst.msk [vmem:[%s1319 + $0x30] sm:$0xff] %vm1190, %v1314
          %1327 = vst.msk [vmem:[%s1319 + $0x38] sm:$0xff] %vm1190, %v1315
        $region52: #{tpu_custom_call.1} parent=27 // pred_fallthru
          _
        %s1328 = smul.u32 16, %s22
        %p1329 = scmp.lt.s32.totalorder %s21, 1
        %s1330 = scalar_select %p1329, %s21, 1
        %p1331 = scmp.lt.s32.totalorder %s1328, 79
        %s1332 = scalar_select %p1331, %s1328, 79
        %s1333 = smul.addr %s1330, 80
        %s1334 = sadd.s32 %s1332, %s1333
        %s1335 = smul.addr %s1334, 8
        %s1336 = scalar_lea.vmem %s2, %s1335
        // Predicated region
        $region53: #{tpu_custom_call.1} parent=27 // pred_check
          %p1337 = pneg %p104
        $region54: #{tpu_custom_call.1} parent=27 // pred_check_branch
          %1339 = sbr.rel (%p1337) target = $region56
        $region55: #{tpu_custom_call.1} parent=27 // pred_region
          %s1340 = smul.u32 16, %s22
        $region56: #{tpu_custom_call.1} parent=27 // pred_fallthru
          _
      $region28: #{tpu_custom_call.1} parent=5 // pred_fallthru
        _
      %p1341 = scmp.le.s32.totalorder 2, %s11
      // Predicated region
      $region57: #{tpu_custom_call.1} parent=5 // pred_check
        %p1342 = pneg %p1341
      $region58: #{tpu_custom_call.1} parent=5 // pred_check_branch
        %1344 = sbr.rel (%p1342) target = $region60
      $region59: #{tpu_custom_call.1} parent=5 // pred_region
        %s1345 = ssub.s32 %s11, 2
        // Predicated region
        $region61: #{tpu_custom_call.1} parent=59 // pred_check
          %p1346 = pneg %p110
        $region62: #{tpu_custom_call.1} parent=59 // pred_check_branch
          %1348 = sbr.rel (%p1346) target = $region64
        $region63: #{tpu_custom_call.1} parent=59 // pred_region
          %s1349 = smul.u32 16, %s25
          %p1350 = scmp.lt.s32.totalorder %s24, 1
          %s1351 = scalar_select %p1350, %s24, 1
          %p1352 = scmp.lt.s32.totalorder %s1349, 79
          %s1353 = scalar_select %p1352, %s1349, 79
          %s1354 = smul.addr %s1351, 80
          %s1355 = sadd.s32 %s1353, %s1354
          %s1356 = smul.addr %s1355, 8
          %s1357 = scalar_lea.vmem %s2, %s1356
        $region64: #{tpu_custom_call.1} parent=59 // pred_fallthru
          _
      $region60: #{tpu_custom_call.1} parent=5 // pred_fallthru
        _
    $region6: #{tpu_custom_call.1} parent=1 // loop_footer
      %s15 = sadd.s32 1, %s11
    $region7: #{tpu_custom_call.1} parent=1 // loop_footer_branch
      %10 = sbr.rel target = $region3
    $region8: #{tpu_custom_call.1} parent=1 // loop_exit
      _
    %1358 = vsyncpa [#allocation6], 1
    %s1359 = scalar_lea.sflag [#allocation6], 1
    %1360 = vsyncpa %s1359, 1

</llo_original>
